<compile_context>
chip_gen: v5e
topology: v5e:2x2
jax: 0.10.0
libtpu: 0.0.40
codegen_flags: <defaults>
</compile_context>

<pallas_src>
import functools

import jax
import jax.numpy as jnp
from jax.experimental import pallas as pl
from jax.experimental.pallas import tpu as pltpu


DIM_PAD = 128          # lane-dense padded embedding width
NEG_BIG = -1e30        # additive mask bias (exp() underflows to exactly 0)


# ----------------------------------------------------------------------------
# Host-side helpers: rotary tables and weight packing / padding.
# ----------------------------------------------------------------------------
def _rotary_tables(n, head_dim):
    inv_freq = 1.0 / (10000.0 ** (jnp.arange(0, head_dim, 2, dtype=jnp.float32)
                                  / head_dim))
    seq = jnp.arange(n, dtype=jnp.float32)
    freqs = seq[:, None] * inv_freq[None, :]           # (n, head_dim/2)
    pos = jnp.concatenate([freqs, freqs], axis=-1)     # (n, head_dim)
    return jnp.cos(pos), jnp.sin(pos)


def init_layer_params(key, dim, heads, head_dim):
    """Same parameterization as the PyTorch module (weights stored (in, out))."""
    inner = heads * head_dim
    k1, k2, k3 = jax.random.split(key, 3)
    s = 0.05
    return dict(
        wqkv=jax.random.normal(k1, (dim, 3 * inner), jnp.float32) * s,
        w1=jax.random.normal(k2, (inner, dim), jnp.float32) * s,
        w2=jax.random.normal(k3, (dim, dim), jnp.float32) * s,
        gamma=jnp.ones((1, dim), jnp.float32),
    )


def _fold_rotate_half(w, heads, head_dim):
    """Columns of w are (head, d) h-major.  Return W_rot such that
    x @ W_rot == rotate_half(x @ W) applied per head."""
    dim = w.shape[0]
    half = head_dim // 2
    w3 = w.reshape(dim, heads, 2, half)                 # (dim, h, j, half)
    w_rot = jnp.concatenate([-w3[:, :, 1, :], w3[:, :, 0, :]], axis=-1)
    return w_rot.reshape(dim, heads * head_dim)


def pack_params(layer_params, heads, head_dim, dim_p=DIM_PAD):
    """Stack per-layer weights on a leading depth axis, fuse the five
    projections into one matrix, fold rotate_half + softmax scale into the
    query weights, and zero-pad the embedding dim to 128 lanes."""
    inner = heads * head_dim
    scale = head_dim ** -0.5
    wproj, w1s, w2s, gammas = [], [], [], []
    for p in layer_params:
        dim = p["wqkv"].shape[0]
        wq = p["wqkv"][:, :inner]
        wk = p["wqkv"][:, inner:2 * inner]
        wv = p["wqkv"][:, 2 * inner:]
        wq_s = wq * scale                                   # scale folded
        wqr_s = _fold_rotate_half(wq, heads, head_dim) * scale
        wkr = _fold_rotate_half(wk, heads, head_dim)
        wp = jnp.concatenate([wq_s, wqr_s, wk, wkr, wv], axis=1)  # (dim, 5*inner)
        wp = jnp.pad(wp, ((0, dim_p - dim), (0, 0)))        # K padded to 128
        wproj.append(wp)
        w1s.append(jnp.pad(p["w1"], ((0, 0), (0, dim_p - dim))))
        w2s.append(jnp.pad(p["w2"], ((0, dim_p - dim), (0, dim_p - dim))))
        # gamma padded with ZEROS so padded output columns stay exactly 0.
        gammas.append(jnp.pad(p["gamma"], ((0, 0), (0, dim_p - dim))))
    st = lambda xs: jnp.stack(xs, axis=0).astype(jnp.float32)
    return dict(wproj=st(wproj), w1=st(w1s), w2=st(w2s), gamma=st(gammas))


# ----------------------------------------------------------------------------
# Fused Transformer kernel: grid = (depth,).  The running hidden state is
# carried in VMEM scratch across the depth ("arbitrary") axis; the mask bias
# is built once at layer 0 and reused.
# ----------------------------------------------------------------------------
def transformer_kernel(x_ref, kv_ref, cos_ref, sin_ref,
                       wproj_ref, w1_ref, w2_ref, gamma_ref,
                       o_ref, x_state, bias_state,
                       *, b, n, dim, heads, head_dim, ar_masking):
    layer = pl.program_id(0)
    inner = heads * head_dim
    dim_p = x_state.shape[-1]
    rows = b * n

    @pl.when(layer == 0)
    def _init():
        # Hidden state (lane-dense, zero padded beyond `dim`).
        x_state[...] = x_ref[...].reshape(rows, dim_p)
        # Additive mask bias, built once: key-padding keep + optional causal.
        keep = kv_ref[...] > 0.5                             # (b, n)
        keep_bnn = jnp.broadcast_to(keep[:, None, :], (b, n, n))
        if ar_masking:
            row_ids = jax.lax.broadcasted_iota(jnp.int32, (n, n), 0)
            col_ids = jax.lax.broadcasted_iota(jnp.int32, (n, n), 1)
            keep_bnn = jnp.logical_and(keep_bnn, (row_ids >= col_ids)[None])
        bias = jnp.where(keep_bnn, 0.0, NEG_BIG)            # (b, n, n) f32
        # Expand to the (head-major, batch-minor) layout used by the scores.
        bias_state[...] = jnp.broadcast_to(
            bias[None], (heads, b, n, n)).reshape(heads * b, n, n)

    x = x_state[...]                                         # (rows, dim_p) f32

    # One fused projection matmul (K = dim_p = 128, N = 5*inner).
    proj = jnp.dot(x, wproj_ref[0], preferred_element_type=jnp.float32)

    cos = cos_ref[...]                                       # (rows, inner)
    sin = sin_ref[...]
    # RoPE is pre-folded into wq_rot / wk_rot -> pure elementwise combine.
    q = proj[:, 0:inner] * cos + proj[:, inner:2 * inner] * sin
    k = proj[:, 2 * inner:3 * inner] * cos + proj[:, 3 * inner:4 * inner] * sin
    v = proj[:, 4 * inner:5 * inner]

    def to_heads(t):   # (rows, inner) -> (heads*b, n, head_dim), head-major
        parts = [t[:, h * head_dim:(h + 1) * head_dim].reshape(b, n, head_dim)
                 for h in range(heads)]
        return jnp.concatenate(parts, axis=0)

    qh, kh, vh = to_heads(q), to_heads(k), to_heads(v)

    # Batched (over heads*b) attention scores; scale already folded into wq.
    scores = jax.lax.dot_general(
        qh, kh, (((2,), (2,)), ((0,), (0,))),
        preferred_element_type=jnp.float32)                  # (heads*b, n, n)
    scores = scores + bias_state[...]

    # Softmax in f32 (exact divide for parity with the PyTorch module;
    # pl.reciprocal(..., approx=True) is the EUP-offload option if looser
    # parity is acceptable).
    m = jnp.max(scores, axis=-1, keepdims=True)
    e = jnp.exp(scores - m)
    denom = jnp.sum(e, axis=-1, keepdims=True)
    attn = e / denom

    ctx = jax.lax.dot_general(
        attn, vh, (((2,), (1,)), ((0,), (0,))),
        preferred_element_type=jnp.float32)                  # (heads*b, n, d)

    # Re-assemble ctx as (rows, inner) and run to_out with single matmuls.
    ctx_parts = [ctx[h * b:(h + 1) * b] for h in range(heads)]   # (b, n, d)
    ctx2 = jnp.concatenate(ctx_parts, axis=-1).reshape(rows, inner)

    h1 = jnp.maximum(
        jnp.dot(ctx2, w1_ref[0], preferred_element_type=jnp.float32), 0.0)
    proj2 = jnp.dot(h1, w2_ref[0], preferred_element_type=jnp.float32)

    # AttnLayerNorm (gamma learned, beta = 0, eps = 1e-5) + residual.
    # Statistics use the TRUE dim; padded columns of proj2 are exactly zero
    # and gamma's padding is zero, so the padding stays zero after the norm.
    inv_dim = 1.0 / dim
    mu = jnp.sum(proj2, axis=-1, keepdims=True) * inv_dim
    ex2 = jnp.sum(proj2 * proj2, axis=-1, keepdims=True) * inv_dim
    var = ex2 - mu * mu
    normed = (proj2 - mu) * jax.lax.rsqrt(var + 1e-5) * gamma_ref[0]

    new_x = normed + x
    x_state[...] = new_x

    @pl.when(layer == pl.num_programs(0) - 1)
    def _finalize():
        o_ref[...] = new_x.reshape(b, n, dim_p)


def transformer_forward(x, key_keep, packed, *, heads, head_dim,
                        ar_masking=False):
    """x: (b, n, dim) f32; key_keep: (b, n) bool key-validity (True = attend)."""
    b, n, dim = x.shape
    depth, dim_p = packed["wproj"].shape[0], packed["wproj"].shape[1]
    inner = heads * head_dim

    # Lane-dense padded activations (stripped again after the kernel).
    x_p = jnp.pad(x, ((0, 0), (0, 0), (0, dim_p - dim)))
    cos, sin = _rotary_tables(n, head_dim)
    cos_all = jnp.tile(jnp.tile(cos, (1, heads)), (b, 1))    # (b*n, inner)
    sin_all = jnp.tile(jnp.tile(sin, (1, heads)), (b, 1))
    kv = key_keep.astype(jnp.float32)                        # (b, n)

    kernel = functools.partial(transformer_kernel, b=b, n=n, dim=dim,
                               heads=heads, head_dim=head_dim,
                               ar_masking=ar_masking)

    out_p = pl.pallas_call(
        kernel,
        out_shape=jax.ShapeDtypeStruct((b, n, dim_p), jnp.float32),
        grid=(depth,),
        in_specs=[
            pl.BlockSpec((b, n, dim_p), lambda l: (0, 0, 0)),       # x (padded)
            pl.BlockSpec((b, n), lambda l: (0, 0)),                 # key keep
            pl.BlockSpec((b * n, inner), lambda l: (0, 0)),         # cos
            pl.BlockSpec((b * n, inner), lambda l: (0, 0)),         # sin
            pl.BlockSpec((1, dim_p, 5 * inner), lambda l: (l, 0, 0)),  # fused proj
            pl.BlockSpec((1, inner, dim_p), lambda l: (l, 0, 0)),   # w1
            pl.BlockSpec((1, dim_p, dim_p), lambda l: (l, 0, 0)),   # w2
            pl.BlockSpec((1, 1, dim_p), lambda l: (l, 0, 0)),       # gamma
        ],
        out_specs=pl.BlockSpec((b, n, dim_p), lambda l: (0, 0, 0)),
        scratch_shapes=[
            pltpu.VMEM((b * n, dim_p), jnp.float32),        # running hidden state
            pltpu.VMEM((heads * b, n, n), jnp.float32),     # additive mask bias
        ],
        compiler_params=pltpu.CompilerParams(
            dimension_semantics=("arbitrary",)),
    )(x_p, kv, cos_all, sin_all,
      packed["wproj"], packed["w1"], packed["w2"], packed["gamma"])
    return out_p[..., :dim]


# ----------------------------------------------------------------------------
# Pure-JAX reference (f32, HIGHEST matmul precision) built from the ORIGINAL
# unpacked weights, mirroring the PyTorch module exactly.
# ----------------------------------------------------------------------------
def reference_forward(x, key_keep, layer_params, *, heads, head_dim,
                      ar_masking=False):
    b, n, dim = x.shape
    inner = heads * head_dim
    scale = head_dim ** -0.5
    half = head_dim // 2
    cos, sin = _rotary_tables(n, head_dim)
    keep = key_keep[:, None, None, :]                        # (b,1,1,n)
    if ar_masking:
        causal_keep = ~jnp.triu(jnp.ones((n, n), dtype=bool), 1)
        keep = jnp.logical_and(keep, causal_keep[None, None])
    neg_max = -jnp.finfo(jnp.float32).max
    hp = jax.lax.Precision.HIGHEST

    def rope(t):  # (b, h, n, d)
        t1, t2 = t[..., :half], t[..., half:]
        rot = jnp.concatenate([-t2, t1], axis=-1)
        return t * cos + rot * sin

    for p in layer_params:
        qkv = jnp.einsum('bnd,df->bnf', x, p["wqkv"], precision=hp)
        q, k, v = jnp.split(qkv, 3, axis=-1)
        q, k, v = (t.reshape(b, n, heads, head_dim).transpose(0, 2, 1, 3)
                   for t in (q, k, v))
        q, k = rope(q), rope(k)
        dots = jnp.einsum('bhid,bhjd->bhij', q, k, precision=hp) * scale
        dots = jnp.where(keep, dots, neg_max)
        attn = jax.nn.softmax(dots, axis=-1)
        out = jnp.einsum('bhij,bhjd->bhid', attn, v, precision=hp)
        out = out.transpose(0, 2, 1, 3).reshape(b, n, inner)
        h1 = jnp.maximum(jnp.einsum('bnf,fd->bnd', out, p["w1"], precision=hp),
                         0.0)
        proj = jnp.einsum('bnd,de->bne', h1, p["w2"], precision=hp)
        mu = jnp.mean(proj, axis=-1, keepdims=True)
        var = jnp.mean((proj - mu) ** 2, axis=-1, keepdims=True)
        normed = (proj - mu) * jax.lax.rsqrt(var + 1e-5) * p["gamma"][0]
        x = normed + x
    return x


# ----------------------------------------------------------------------------
if __name__ == "__main__":
    batch, seq = 2, 8
    embedding_dim, depth, num_attn_heads, attn_head_dim = 32, 2, 4, 8

    key = jax.random.PRNGKey(0)
    kx, *klayers = jax.random.split(key, 1 + depth)
    x = jax.random.normal(kx, (batch, seq, embedding_dim), jnp.float32)

    # key-padding style boolean attention mask (True = attend); batch 1 has
    # its last two key positions masked out.
    valid_len = jnp.array([seq, seq - 2])
    key_keep = jnp.arange(seq)[None, :] < valid_len[:, None]        # (b, n)

    layer_params = [init_layer_params(k, embedding_dim, num_attn_heads,
                                      attn_head_dim) for k in klayers]
    packed = pack_params(layer_params, num_attn_heads, attn_head_dim)

    out = transformer_forward(x, key_keep, packed,
                              heads=num_attn_heads, head_dim=attn_head_dim,
                              ar_masking=True)
    out = jax.block_until_ready(out)

    ref = reference_forward(x, key_keep, layer_params,
                            heads=num_attn_heads, head_dim=attn_head_dim,
                            ar_masking=True)
    ref = jax.block_until_ready(ref)

    assert out.shape == (batch, seq, embedding_dim)
    assert bool(jnp.all(jnp.isfinite(out)))
    max_diff = float(jnp.max(jnp.abs(out - ref)))
    assert max_diff < 1e-2, f"mismatch vs reference: {max_diff}"
    print("KERNEL_OK")
</pallas_src>

<mosaic_0001>
module attributes {stable_mosaic.version = 11 : i64} {
  func.func @transformer_kernel(%arg0: i32, %arg1: memref<2x8x128xf32, #tpu.memory_space<vmem>>, %arg2: memref<2x8xf32, #tpu.memory_space<vmem>>, %arg3: memref<16x32xf32, #tpu.memory_space<vmem>>, %arg4: memref<16x32xf32, #tpu.memory_space<vmem>>, %arg5: memref<1x128x160xf32, #tpu.memory_space<vmem>>, %arg6: memref<1x32x128xf32, #tpu.memory_space<vmem>>, %arg7: memref<1x128x128xf32, #tpu.memory_space<vmem>>, %arg8: memref<1x1x128xf32, #tpu.memory_space<vmem>>, %arg9: memref<2x8x128xf32, #tpu.memory_space<vmem>>, %arg10: memref<16x128xf32, #tpu.memory_space<vmem>>, %arg11: memref<8x8x8xf32, #tpu.memory_space<vmem>>) attributes {dimension_semantics = [#tpu.dimension_semantics<arbitrary>], iteration_bounds = array<i64: 2>, scalar_prefetch = 0 : i64, scratch_operands = 2 : i64, tpu.core_type = #tpu.core_type<tc>, window_params = [{pipeline_mode = #tpu.pipeline_mode<synchronous>, transform_indices = @transform_0, window_bounds = array<i64: 2, 8, 128>}, {pipeline_mode = #tpu.pipeline_mode<synchronous>, transform_indices = @transform_1, window_bounds = array<i64: 2, 8>}, {pipeline_mode = #tpu.pipeline_mode<synchronous>, transform_indices = @transform_2, window_bounds = array<i64: 16, 32>}, {pipeline_mode = #tpu.pipeline_mode<synchronous>, transform_indices = @transform_3, window_bounds = array<i64: 16, 32>}, {transform_indices = @transform_4, window_bounds = array<i64: 1, 128, 160>}, {transform_indices = @transform_5, window_bounds = array<i64: 1, 32, 128>}, {transform_indices = @transform_6, window_bounds = array<i64: 1, 128, 128>}, {transform_indices = @transform_7, window_bounds = array<i64: 1, 1, 128>}, {pipeline_mode = #tpu.pipeline_mode<synchronous>, transform_indices = @transform_8, window_bounds = array<i64: 2, 8, 128>}]} {
    %c0_i32 = arith.constant 0 : i32
    %0 = arith.cmpi eq, %arg0, %c0_i32 : i32
    %1 = arith.extui %0 : i1 to i32
    %c0_i32_0 = arith.constant 0 : i32
    %2 = arith.cmpi ne, %1, %c0_i32_0 : i32
    scf.if %2 {
      %c0_36 = arith.constant 0 : index
      %c0_37 = arith.constant 0 : index
      %c0_38 = arith.constant 0 : index
      %101 = vector.load %arg1[%c0_36, %c0_37, %c0_38] : memref<2x8x128xf32, #tpu.memory_space<vmem>>, vector<2x8x128xf32>
      %102 = vector.shape_cast %101 : vector<2x8x128xf32> to vector<16x128xf32>
      %c0_39 = arith.constant 0 : index
      %c0_40 = arith.constant 0 : index
      %103 = vector.load %arg10[%c0_39, %c0_40] : memref<16x128xf32, #tpu.memory_space<vmem>>, vector<16x128xf32>
      tpu.vector_store %arg10[%c0_39, %c0_40], %102 {strides = array<i32>} : memref<16x128xf32, #tpu.memory_space<vmem>>, vector<16x128xf32>,
      %c0_41 = arith.constant 0 : index
      %c0_42 = arith.constant 0 : index
      %104 = vector.load %arg2[%c0_41, %c0_42] : memref<2x8xf32, #tpu.memory_space<vmem>>, vector<2x8xf32>
      %cst_43 = arith.constant 5.000000e-01 : f32
      %105 = vector.broadcast %cst_43 : f32 to vector<2x8xf32>
      %106 = arith.cmpf ogt, %104, %105 : vector<2x8xf32>
      %107 = vector.shape_cast %106 : vector<2x8xi1> to vector<2x1x8xi1>
      %108 = vector.shape_cast %107 : vector<2x1x8xi1> to vector<2x1x8xi1>
      %109 = vector.broadcast %108 : vector<2x1x8xi1> to vector<2x8x8xi1>
      %110 = tpu.iota {dimensions = array<i32: 0>} : vector<8x8xi32>
      %111 = tpu.iota {dimensions = array<i32: 1>} : vector<8x8xi32>
      %112 = arith.cmpi sge, %110, %111 : vector<8x8xi32>
      %113 = vector.shape_cast %112 : vector<8x8xi1> to vector<1x8x8xi1>
      %114 = vector.broadcast %113 : vector<1x8x8xi1> to vector<2x8x8xi1>
      %115 = arith.andi %109, %114 : vector<2x8x8xi1>
      %cst_44 = arith.constant 0.000000e+00 : f32
      %cst_45 = arith.constant -1.000000e+30 : f32
      %116 = vector.broadcast %cst_44 : f32 to vector<2x8x8xf32>
      %117 = vector.broadcast %cst_45 : f32 to vector<2x8x8xf32>
      %118 = arith.select %115, %116, %117 : vector<2x8x8xi1>, vector<2x8x8xf32>
      %119 = vector.shape_cast %118 : vector<2x8x8xf32> to vector<1x2x8x8xf32>
      %120 = vector.shape_cast %119 : vector<1x2x8x8xf32> to vector<1x2x8x8xf32>
      %121 = vector.broadcast %120 : vector<1x2x8x8xf32> to vector<4x2x8x8xf32>
      %122 = vector.shape_cast %121 : vector<4x2x8x8xf32> to vector<8x8x8xf32>
      %c0_46 = arith.constant 0 : index
      %c0_47 = arith.constant 0 : index
      %c0_48 = arith.constant 0 : index
      %123 = vector.load %arg11[%c0_46, %c0_47, %c0_48] : memref<8x8x8xf32, #tpu.memory_space<vmem>>, vector<8x8x8xf32>
      tpu.vector_store %arg11[%c0_46, %c0_47, %c0_48], %122 {strides = array<i32>} : memref<8x8x8xf32, #tpu.memory_space<vmem>>, vector<8x8x8xf32>,
    } else {
    }
    %c0 = arith.constant 0 : index
    %c0_1 = arith.constant 0 : index
    %3 = vector.load %arg10[%c0, %c0_1] : memref<16x128xf32, #tpu.memory_space<vmem>>, vector<16x128xf32>
    %c0_2 = arith.constant 0 : index
    %c0_3 = arith.constant 0 : index
    %c0_4 = arith.constant 0 : index
    %4 = vector.load %arg5[%c0_2, %c0_3, %c0_4] : memref<1x128x160xf32, #tpu.memory_space<vmem>>, vector<1x128x160xf32>
    %5 = vector.shape_cast %4 : vector<1x128x160xf32> to vector<128x160xf32>
    %cst = arith.constant dense<0.000000e+00> : vector<16x160xf32>
    %6 = tpu.matmul %3, %5, %cst {dimension_numbers = #tpu.dot_dimension_numbers<[1], [0], [0], [1], [0, 0, 1, 1], [], []>} : vector<16x128xf32>, vector<128x160xf32>, vector<16x160xf32> -> vector<16x160xf32>
    %c0_5 = arith.constant 0 : index
    %c0_6 = arith.constant 0 : index
    %7 = vector.load %arg3[%c0_5, %c0_6] : memref<16x32xf32, #tpu.memory_space<vmem>>, vector<16x32xf32>
    %c0_7 = arith.constant 0 : index
    %c0_8 = arith.constant 0 : index
    %8 = vector.load %arg4[%c0_7, %c0_8] : memref<16x32xf32, #tpu.memory_space<vmem>>, vector<16x32xf32>
    %9 = vector.extract_strided_slice %6 {offsets = [0, 0], sizes = [16, 32], strides = [1, 1]} : vector<16x160xf32> to vector<16x32xf32>
    %10 = arith.mulf %9, %7 : vector<16x32xf32>
    %11 = vector.extract_strided_slice %6 {offsets = [0, 32], sizes = [16, 32], strides = [1, 1]} : vector<16x160xf32> to vector<16x32xf32>
    %12 = arith.mulf %11, %8 : vector<16x32xf32>
    %13 = arith.addf %10, %12 : vector<16x32xf32>
    %14 = vector.extract_strided_slice %6 {offsets = [0, 64], sizes = [16, 32], strides = [1, 1]} : vector<16x160xf32> to vector<16x32xf32>
    %15 = arith.mulf %14, %7 : vector<16x32xf32>
    %16 = vector.extract_strided_slice %6 {offsets = [0, 96], sizes = [16, 32], strides = [1, 1]} : vector<16x160xf32> to vector<16x32xf32>
    %17 = arith.mulf %16, %8 : vector<16x32xf32>
    %18 = arith.addf %15, %17 : vector<16x32xf32>
    %19 = vector.extract_strided_slice %6 {offsets = [0, 128], sizes = [16, 32], strides = [1, 1]} : vector<16x160xf32> to vector<16x32xf32>
    %20 = vector.extract_strided_slice %13 {offsets = [0, 0], sizes = [16, 8], strides = [1, 1]} : vector<16x32xf32> to vector<16x8xf32>
    %21 = vector.shape_cast %20 : vector<16x8xf32> to vector<2x8x8xf32>
    %22 = vector.extract_strided_slice %13 {offsets = [0, 8], sizes = [16, 8], strides = [1, 1]} : vector<16x32xf32> to vector<16x8xf32>
    %23 = vector.shape_cast %22 : vector<16x8xf32> to vector<2x8x8xf32>
    %24 = vector.extract_strided_slice %13 {offsets = [0, 16], sizes = [16, 8], strides = [1, 1]} : vector<16x32xf32> to vector<16x8xf32>
    %25 = vector.shape_cast %24 : vector<16x8xf32> to vector<2x8x8xf32>
    %26 = vector.extract_strided_slice %13 {offsets = [0, 24], sizes = [16, 8], strides = [1, 1]} : vector<16x32xf32> to vector<16x8xf32>
    %27 = vector.shape_cast %26 : vector<16x8xf32> to vector<2x8x8xf32>
    %28 = tpu.concatenate %21, %23, %25, %27 in 0 : vector<2x8x8xf32>, vector<2x8x8xf32>, vector<2x8x8xf32>, vector<2x8x8xf32> -> vector<8x8x8xf32>
    %29 = vector.extract_strided_slice %18 {offsets = [0, 0], sizes = [16, 8], strides = [1, 1]} : vector<16x32xf32> to vector<16x8xf32>
    %30 = vector.shape_cast %29 : vector<16x8xf32> to vector<2x8x8xf32>
    %31 = vector.extract_strided_slice %18 {offsets = [0, 8], sizes = [16, 8], strides = [1, 1]} : vector<16x32xf32> to vector<16x8xf32>
    %32 = vector.shape_cast %31 : vector<16x8xf32> to vector<2x8x8xf32>
    %33 = vector.extract_strided_slice %18 {offsets = [0, 16], sizes = [16, 8], strides = [1, 1]} : vector<16x32xf32> to vector<16x8xf32>
    %34 = vector.shape_cast %33 : vector<16x8xf32> to vector<2x8x8xf32>
    %35 = vector.extract_strided_slice %18 {offsets = [0, 24], sizes = [16, 8], strides = [1, 1]} : vector<16x32xf32> to vector<16x8xf32>
    %36 = vector.shape_cast %35 : vector<16x8xf32> to vector<2x8x8xf32>
    %37 = tpu.concatenate %30, %32, %34, %36 in 0 : vector<2x8x8xf32>, vector<2x8x8xf32>, vector<2x8x8xf32>, vector<2x8x8xf32> -> vector<8x8x8xf32>
    %38 = vector.extract_strided_slice %19 {offsets = [0, 0], sizes = [16, 8], strides = [1, 1]} : vector<16x32xf32> to vector<16x8xf32>
    %39 = vector.shape_cast %38 : vector<16x8xf32> to vector<2x8x8xf32>
    %40 = vector.extract_strided_slice %19 {offsets = [0, 8], sizes = [16, 8], strides = [1, 1]} : vector<16x32xf32> to vector<16x8xf32>
    %41 = vector.shape_cast %40 : vector<16x8xf32> to vector<2x8x8xf32>
    %42 = vector.extract_strided_slice %19 {offsets = [0, 16], sizes = [16, 8], strides = [1, 1]} : vector<16x32xf32> to vector<16x8xf32>
    %43 = vector.shape_cast %42 : vector<16x8xf32> to vector<2x8x8xf32>
    %44 = vector.extract_strided_slice %19 {offsets = [0, 24], sizes = [16, 8], strides = [1, 1]} : vector<16x32xf32> to vector<16x8xf32>
    %45 = vector.shape_cast %44 : vector<16x8xf32> to vector<2x8x8xf32>
    %46 = tpu.concatenate %39, %41, %43, %45 in 0 : vector<2x8x8xf32>, vector<2x8x8xf32>, vector<2x8x8xf32>, vector<2x8x8xf32> -> vector<8x8x8xf32>
    %cst_9 = arith.constant dense<0.000000e+00> : vector<8x8x8xf32>
    %47 = tpu.matmul %28, %37, %cst_9 {dimension_numbers = #tpu.dot_dimension_numbers<[2], [2], [1], [1], [0, 0, 0, 1, 1, 1], [0], [0]>} : vector<8x8x8xf32>, vector<8x8x8xf32>, vector<8x8x8xf32> -> vector<8x8x8xf32>
    %c0_10 = arith.constant 0 : index
    %c0_11 = arith.constant 0 : index
    %c0_12 = arith.constant 0 : index
    %48 = vector.load %arg11[%c0_10, %c0_11, %c0_12] : memref<8x8x8xf32, #tpu.memory_space<vmem>>, vector<8x8x8xf32>
    %49 = arith.addf %47, %48 : vector<8x8x8xf32>
    %cst_13 = arith.constant dense<0xFF800000> : vector<8x8xf32>
    %50 = vector.multi_reduction <maximumf>, %49, %cst_13 [2] : vector<8x8x8xf32> to vector<8x8xf32>
    %51 = vector.shape_cast %50 : vector<8x8xf32> to vector<8x8x1xf32>
    %52 = vector.broadcast %51 : vector<8x8x1xf32> to vector<8x8x8xf32>
    %53 = arith.subf %49, %52 : vector<8x8x8xf32>
    %54 = math.exp %53 : vector<8x8x8xf32>
    %cst_14 = arith.constant dense<0.000000e+00> : vector<8x8xf32>
    %55 = vector.multi_reduction <add>, %54, %cst_14 [2] : vector<8x8x8xf32> to vector<8x8xf32>
    %56 = vector.shape_cast %55 : vector<8x8xf32> to vector<8x8x1xf32>
    %57 = vector.broadcast %56 : vector<8x8x1xf32> to vector<8x8x8xf32>
    %58 = arith.divf %54, %57 : vector<8x8x8xf32>
    %cst_15 = arith.constant dense<0.000000e+00> : vector<8x8x8xf32>
    %59 = tpu.matmul %58, %46, %cst_15 {dimension_numbers = #tpu.dot_dimension_numbers<[2], [1], [1], [2], [0, 0, 0, 1, 1, 2], [0], [0]>} : vector<8x8x8xf32>, vector<8x8x8xf32>, vector<8x8x8xf32> -> vector<8x8x8xf32>
    %60 = vector.extract_strided_slice %59 {offsets = [0, 0, 0], sizes = [2, 8, 8], strides = [1, 1, 1]} : vector<8x8x8xf32> to vector<2x8x8xf32>
    %61 = vector.extract_strided_slice %59 {offsets = [2, 0, 0], sizes = [2, 8, 8], strides = [1, 1, 1]} : vector<8x8x8xf32> to vector<2x8x8xf32>
    %62 = vector.extract_strided_slice %59 {offsets = [4, 0, 0], sizes = [2, 8, 8], strides = [1, 1, 1]} : vector<8x8x8xf32> to vector<2x8x8xf32>
    %63 = vector.extract_strided_slice %59 {offsets = [6, 0, 0], sizes = [2, 8, 8], strides = [1, 1, 1]} : vector<8x8x8xf32> to vector<2x8x8xf32>
    %64 = tpu.concatenate %60, %61, %62, %63 in 2 : vector<2x8x8xf32>, vector<2x8x8xf32>, vector<2x8x8xf32>, vector<2x8x8xf32> -> vector<2x8x32xf32>
    %65 = vector.shape_cast %64 : vector<2x8x32xf32> to vector<16x32xf32>
    %c0_16 = arith.constant 0 : index
    %c0_17 = arith.constant 0 : index
    %c0_18 = arith.constant 0 : index
    %66 = vector.load %arg6[%c0_16, %c0_17, %c0_18] : memref<1x32x128xf32, #tpu.memory_space<vmem>>, vector<1x32x128xf32>
    %67 = vector.shape_cast %66 : vector<1x32x128xf32> to vector<32x128xf32>
    %cst_19 = arith.constant dense<0.000000e+00> : vector<16x128xf32>
    %68 = tpu.matmul %65, %67, %cst_19 {dimension_numbers = #tpu.dot_dimension_numbers<[1], [0], [0], [1], [0, 0, 1, 1], [], []>} : vector<16x32xf32>, vector<32x128xf32>, vector<16x128xf32> -> vector<16x128xf32>
    %cst_20 = arith.constant 0.000000e+00 : f32
    %69 = vector.broadcast %cst_20 : f32 to vector<16x128xf32>
    %70 = arith.maximumf %68, %69 : vector<16x128xf32>
    %c0_21 = arith.constant 0 : index
    %c0_22 = arith.constant 0 : index
    %c0_23 = arith.constant 0 : index
    %71 = vector.load %arg7[%c0_21, %c0_22, %c0_23] : memref<1x128x128xf32, #tpu.memory_space<vmem>>, vector<1x128x128xf32>
    %72 = vector.shape_cast %71 : vector<1x128x128xf32> to vector<128x128xf32>
    %cst_24 = arith.constant dense<0.000000e+00> : vector<16x128xf32>
    %73 = tpu.matmul %70, %72, %cst_24 {dimension_numbers = #tpu.dot_dimension_numbers<[1], [0], [0], [1], [0, 0, 1, 1], [], []>} : vector<16x128xf32>, vector<128x128xf32>, vector<16x128xf32> -> vector<16x128xf32>
    %cst_25 = arith.constant dense<0.000000e+00> : vector<16xf32>
    %74 = vector.multi_reduction <add>, %73, %cst_25 [1] : vector<16x128xf32> to vector<16xf32>
    %75 = vector.shape_cast %74 : vector<16xf32> to vector<16x1xf32>
    %cst_26 = arith.constant 3.125000e-02 : f32
    %76 = vector.broadcast %cst_26 : f32 to vector<16x1xf32>
    %77 = arith.mulf %75, %76 : vector<16x1xf32>
    %78 = arith.mulf %73, %73 : vector<16x128xf32>
    %cst_27 = arith.constant dense<0.000000e+00> : vector<16xf32>
    %79 = vector.multi_reduction <add>, %78, %cst_27 [1] : vector<16x128xf32> to vector<16xf32>
    %80 = vector.shape_cast %79 : vector<16xf32> to vector<16x1xf32>
    %cst_28 = arith.constant 3.125000e-02 : f32
    %81 = vector.broadcast %cst_28 : f32 to vector<16x1xf32>
    %82 = arith.mulf %80, %81 : vector<16x1xf32>
    %83 = arith.mulf %77, %77 : vector<16x1xf32>
    %84 = arith.subf %82, %83 : vector<16x1xf32>
    %85 = vector.broadcast %77 : vector<16x1xf32> to vector<16x128xf32>
    %86 = arith.subf %73, %85 : vector<16x128xf32>
    %cst_29 = arith.constant 9.99999974E-6 : f32
    %87 = vector.broadcast %cst_29 : f32 to vector<16x1xf32>
    %88 = arith.addf %84, %87 : vector<16x1xf32>
    %89 = math.rsqrt %88 : vector<16x1xf32>
    %90 = vector.broadcast %89 : vector<16x1xf32> to vector<16x128xf32>
    %91 = arith.mulf %86, %90 : vector<16x128xf32>
    %c0_30 = arith.constant 0 : index
    %c0_31 = arith.constant 0 : index
    %c0_32 = arith.constant 0 : index
    %92 = vector.load %arg8[%c0_30, %c0_31, %c0_32] : memref<1x1x128xf32, #tpu.memory_space<vmem>>, vector<1x1x128xf32>
    %93 = vector.shape_cast %92 : vector<1x1x128xf32> to vector<1x128xf32>
    %94 = vector.broadcast %93 : vector<1x128xf32> to vector<16x128xf32>
    %95 = arith.mulf %91, %94 : vector<16x128xf32>
    %96 = arith.addf %95, %3 : vector<16x128xf32>
    %c0_33 = arith.constant 0 : index
    %c0_34 = arith.constant 0 : index
    %97 = vector.load %arg10[%c0_33, %c0_34] : memref<16x128xf32, #tpu.memory_space<vmem>>, vector<16x128xf32>
    tpu.vector_store %arg10[%c0_33, %c0_34], %96 {strides = array<i32>} : memref<16x128xf32, #tpu.memory_space<vmem>>, vector<16x128xf32>,
    %c1_i32 = arith.constant 1 : i32
    %98 = arith.cmpi eq, %arg0, %c1_i32 : i32
    %99 = arith.extui %98 : i1 to i32
    %c0_i32_35 = arith.constant 0 : i32
    %100 = arith.cmpi ne, %99, %c0_i32_35 : i32
    scf.if %100 {
      %101 = vector.shape_cast %96 : vector<16x128xf32> to vector<2x8x128xf32>
      %c0_36 = arith.constant 0 : index
      %c0_37 = arith.constant 0 : index
      %c0_38 = arith.constant 0 : index
      %102 = vector.load %arg9[%c0_36, %c0_37, %c0_38] : memref<2x8x128xf32, #tpu.memory_space<vmem>>, vector<2x8x128xf32>
      tpu.vector_store %arg9[%c0_36, %c0_37, %c0_38], %101 {strides = array<i32>} : memref<2x8x128xf32, #tpu.memory_space<vmem>>, vector<2x8x128xf32>,
    } else {
    }
    return
  }
  func.func @transform_0(%arg0: i32) -> (i32, i32, i32) {
    %c0_i32 = arith.constant 0 : i32
    %c0_i32_0 = arith.constant 0 : i32
    %c0_i32_1 = arith.constant 0 : i32
    %c0_i32_2 = arith.constant 0 : i32
    return %c0_i32, %c0_i32_0, %c0_i32_1 : i32, i32, i32
  }
  func.func @transform_1(%arg0: i32) -> (i32, i32) {
    %c0_i32 = arith.constant 0 : i32
    %c0_i32_0 = arith.constant 0 : i32
    %c0_i32_1 = arith.constant 0 : i32
    return %c0_i32, %c0_i32_0 : i32, i32
  }
  func.func @transform_2(%arg0: i32) -> (i32, i32) {
    %c0_i32 = arith.constant 0 : i32
    %c0_i32_0 = arith.constant 0 : i32
    %c0_i32_1 = arith.constant 0 : i32
    return %c0_i32, %c0_i32_0 : i32, i32
  }
  func.func @transform_3(%arg0: i32) -> (i32, i32) {
    %c0_i32 = arith.constant 0 : i32
    %c0_i32_0 = arith.constant 0 : i32
    %c0_i32_1 = arith.constant 0 : i32
    return %c0_i32, %c0_i32_0 : i32, i32
  }
  func.func @transform_4(%arg0: i32) -> (i32, i32, i32) {
    %c0_i32 = arith.constant 0 : i32
    %c0_i32_0 = arith.constant 0 : i32
    %c0_i32_1 = arith.constant 0 : i32
    return %arg0, %c0_i32, %c0_i32_0 : i32, i32, i32
  }
  func.func @transform_5(%arg0: i32) -> (i32, i32, i32) {
    %c0_i32 = arith.constant 0 : i32
    %c0_i32_0 = arith.constant 0 : i32
    %c0_i32_1 = arith.constant 0 : i32
    return %arg0, %c0_i32, %c0_i32_0 : i32, i32, i32
  }
  func.func @transform_6(%arg0: i32) -> (i32, i32, i32) {
    %c0_i32 = arith.constant 0 : i32
    %c0_i32_0 = arith.constant 0 : i32
    %c0_i32_1 = arith.constant 0 : i32
    return %arg0, %c0_i32, %c0_i32_0 : i32, i32, i32
  }
  func.func @transform_7(%arg0: i32) -> (i32, i32, i32) {
    %c0_i32 = arith.constant 0 : i32
    %c0_i32_0 = arith.constant 0 : i32
    %c0_i32_1 = arith.constant 0 : i32
    return %arg0, %c0_i32, %c0_i32_0 : i32, i32, i32
  }
  func.func @transform_8(%arg0: i32) -> (i32, i32, i32) {
    %c0_i32 = arith.constant 0 : i32
    %c0_i32_0 = arith.constant 0 : i32
    %c0_i32_1 = arith.constant 0 : i32
    %c0_i32_2 = arith.constant 0 : i32
    return %c0_i32, %c0_i32_0, %c0_i32_1 : i32, i32, i32
  }
}

</mosaic_0001>

<llo_original>
// kernel: tpu_custom_call.1
$region0: #{tpu_custom_call.1}
  #allocation0 [shape = 'u32[]', space=smem, size = 0x4, offset = 0x4, fixed_abs, tag = 'smem constant byte address 0x4 - core index']
  #allocation1 [shape = 'u32[72,128]{1,0:T(1,128)}', space=vmem, size = 0x9000, scoped, tag = 'internal scratch']
  #allocation2 [shape = 'f32[16,128]{1,0:T(8,128)}', space=vmem, size = 0x2000, scoped, tag = 'scratch operand']
  #allocation3 [shape = 'f32[8,8,8]{2,1,0:T(8,128)}', space=vmem, size = 0x8000, scoped, tag = 'scratch operand']
  %s0 = inlined_call_operand.vmem [shape: f32[2,8,128], index: 0, kind: input, shape index: {}]
  %s1 = inlined_call_operand.vmem [shape: f32[2,8], index: 1, kind: input, shape index: {}]
  %s2 = inlined_call_operand.vmem [shape: f32[16,32], index: 2, kind: input, shape index: {}]
  %s3 = inlined_call_operand.vmem [shape: f32[16,32], index: 3, kind: input, shape index: {}]
  %s4 = inlined_call_operand.vmem [shape: f32[2,128,160], index: 4, kind: input, shape index: {}]
  %s5 = inlined_call_operand.vmem [shape: f32[2,32,128], index: 5, kind: input, shape index: {}]
  %s6 = inlined_call_operand.vmem [shape: f32[2,128,128], index: 6, kind: input, shape index: {}]
  %s7 = inlined_call_operand.vmem [shape: f32[2,1,128], index: 7, kind: input, shape index: {}]
  %s8 = inlined_call_operand.hbm [shape: f32[2,8,128], index: 8, kind: output, shape index: {}]
  %s9 = sld [smem:[#allocation0]]
  $region73: #{tpu_custom_call.1} parent=0
    _
  %s11 = ssub.s32 1, %s9
  %s12 = scalar_select 0, %s11, %s9
  $region1: #{tpu_custom_call.1} parent=0
    #allocation4 [shape = 'u8[8192]{0}', space=vmem, size = 0x2000, scoped, tag = 'output window, operand 0, single buffered']
    #allocation5 [shape = 's32[2]{0}', space=sflag, size = 0x8, scoped, tag = 'scoped memory for tpu_custom_call.1']
    %13 = vsyncpa [#allocation5], 0
    loop: start=0, step=1, limit=4
    $region2: #{tpu_custom_call.1} parent=1 // loop_pre_header
      _
    $region3: #{tpu_custom_call.1} parent=1 // loop_header
      %s15 = sphi 0, %s19
      %p16 = scmp.ge.s32.totalorder %s15, 4
      %s23 = sphi 0, %s23
      %s25 = sphi 0, %s23
      %s26 = sphi 0, %s25
      %s40 = sphi 0, %s26
      %s44 = sphi 0, %s44
      %s46 = sphi 0, %s44
      %s47 = sphi 0, %s46
      %s61 = sphi 0, %s47
      %s65 = sphi 0, %s65
      %s67 = sphi 0, %s65
      %s68 = sphi 0, %s67
      %s82 = sphi 0, %s68
      %s86 = sphi 0, %s86
      %s88 = sphi 0, %s86
      %s89 = sphi 0, %s88
      %s103 = sphi 0, %s89
      %s109 = sphi 0, %s111
      %s112 = sphi 0, %s109
      %s113 = sphi 0, %s112
      %s129 = sphi 0, %s113
      %s135 = sphi 0, %s137
      %s138 = sphi 0, %s135
      %s139 = sphi 0, %s138
      %s155 = sphi 0, %s139
      %s161 = sphi 0, %s163
      %s164 = sphi 0, %s161
      %s165 = sphi 0, %s164
      %s181 = sphi 0, %s165
      %s187 = sphi 0, %s189
      %s190 = sphi 0, %s187
      %s191 = sphi 0, %s190
      %s207 = sphi 0, %s191
      %s211 = sphi 0, %s211
      %s213 = sphi 0, %s211
      %s214 = sphi 0, %s213
      %s228 = sphi 0, %s214
    $region4: #{tpu_custom_call.1} parent=1 // loop_header_branch
      %18 = sbr.rel (%p16) target = $region8
    $region5: #{tpu_custom_call.1} parent=1 // loop_body
      %s20 = ssub.s32 %s15, 1
      %s21 = ssub.s32 %s15, 2
      %s22 = sadd.s32 %s15, 1
      %s24 = sadd.s32 %s23, 1
      %p27 = scmp.eq.s32.totalorder %s15, 1
      %p28 = scmp.ne.s32.totalorder %s23, %s25
      %p29 = scmp.eq.s32.totalorder %s15, 0
      %p30 = por %p28, %p29
      %p31 = scmp.ne.s32.totalorder %s23, %s25
      %p32 = scmp.eq.s32.totalorder %s20, 1
      %p33 = por %p31, %p32
      %p34 = scmp.ne.s32.totalorder %s25, %s26
      %p35 = scmp.eq.s32.totalorder %s20, 0
      %p36 = por %p34, %p35
      %p37 = scmp.ne.s32.totalorder %s25, %s26
      %p38 = scmp.eq.s32.totalorder %s21, 1
      %p39 = por %p37, %p38
      %p41 = scmp.ne.s32.totalorder %s26, %s40
      %p42 = scmp.eq.s32.totalorder %s21, 0
      %p43 = por %p41, %p42
      %s45 = sadd.s32 %s44, 1
      %p48 = scmp.eq.s32.totalorder %s15, 1
      %p49 = scmp.ne.s32.totalorder %s44, %s46
      %p50 = scmp.eq.s32.totalorder %s15, 0
      %p51 = por %p49, %p50
      %p52 = scmp.ne.s32.totalorder %s44, %s46
      %p53 = scmp.eq.s32.totalorder %s20, 1
      %p54 = por %p52, %p53
      %p55 = scmp.ne.s32.totalorder %s46, %s47
      %p56 = scmp.eq.s32.totalorder %s20, 0
      %p57 = por %p55, %p56
      %p58 = scmp.ne.s32.totalorder %s46, %s47
      %p59 = scmp.eq.s32.totalorder %s21, 1
      %p60 = por %p58, %p59
      %p62 = scmp.ne.s32.totalorder %s47, %s61
      %p63 = scmp.eq.s32.totalorder %s21, 0
      %p64 = por %p62, %p63
      %s66 = sadd.s32 %s65, 1
      %p69 = scmp.eq.s32.totalorder %s15, 1
      %p70 = scmp.ne.s32.totalorder %s65, %s67
      %p71 = scmp.eq.s32.totalorder %s15, 0
      %p72 = por %p70, %p71
      %p73 = scmp.ne.s32.totalorder %s65, %s67
      %p74 = scmp.eq.s32.totalorder %s20, 1
      %p75 = por %p73, %p74
      %p76 = scmp.ne.s32.totalorder %s67, %s68
      %p77 = scmp.eq.s32.totalorder %s20, 0
      %p78 = por %p76, %p77
      %p79 = scmp.ne.s32.totalorder %s67, %s68
      %p80 = scmp.eq.s32.totalorder %s21, 1
      %p81 = por %p79, %p80
      %p83 = scmp.ne.s32.totalorder %s68, %s82
      %p84 = scmp.eq.s32.totalorder %s21, 0
      %p85 = por %p83, %p84
      %s87 = sadd.s32 %s86, 1
      %p90 = scmp.eq.s32.totalorder %s15, 1
      %p91 = scmp.ne.s32.totalorder %s86, %s88
      %p92 = scmp.eq.s32.totalorder %s15, 0
      %p93 = por %p91, %p92
      %p94 = scmp.ne.s32.totalorder %s86, %s88
      %p95 = scmp.eq.s32.totalorder %s20, 1
      %p96 = por %p94, %p95
      %p97 = scmp.ne.s32.totalorder %s88, %s89
      %p98 = scmp.eq.s32.totalorder %s20, 0
      %p99 = por %p97, %p98
      %p100 = scmp.ne.s32.totalorder %s88, %s89
      %p101 = scmp.eq.s32.totalorder %s21, 1
      %p102 = por %p100, %p101
      %p104 = scmp.ne.s32.totalorder %s89, %s103
      %p105 = scmp.eq.s32.totalorder %s21, 0
      %p106 = por %p104, %p105
      %s107 = ssub.s32 %s15, %s22
      %p108 = scmp.eq.s32.totalorder %s107, 0
      %s110 = sadd.s32 %s109, 1
      %s111 = scalar_select %p108, %s109, %s110
      %p114 = pneg %p108
      %p115 = scmp.eq.s32.totalorder %s15, 1
      %p116 = por %p114, %p115
      %p117 = scmp.ne.s32.totalorder %s109, %s112
      %p118 = scmp.eq.s32.totalorder %s15, 0
      %p119 = por %p117, %p118
      %p120 = scmp.ne.s32.totalorder %s109, %s112
      %p121 = scmp.eq.s32.totalorder %s20, 1
      %p122 = por %p120, %p121
      %p123 = scmp.ne.s32.totalorder %s112, %s113
      %p124 = scmp.eq.s32.totalorder %s20, 0
      %p125 = por %p123, %p124
      %p126 = scmp.ne.s32.totalorder %s112, %s113
      %p127 = scmp.eq.s32.totalorder %s21, 1
      %p128 = por %p126, %p127
      %p130 = scmp.ne.s32.totalorder %s113, %s129
      %p131 = scmp.eq.s32.totalorder %s21, 0
      %p132 = por %p130, %p131
      %s133 = ssub.s32 %s15, %s22
      %p134 = scmp.eq.s32.totalorder %s133, 0
      %s136 = sadd.s32 %s135, 1
      %s137 = scalar_select %p134, %s135, %s136
      %p140 = pneg %p134
      %p141 = scmp.eq.s32.totalorder %s15, 1
      %p142 = por %p140, %p141
      %p143 = scmp.ne.s32.totalorder %s135, %s138
      %p144 = scmp.eq.s32.totalorder %s15, 0
      %p145 = por %p143, %p144
      %p146 = scmp.ne.s32.totalorder %s135, %s138
      %p147 = scmp.eq.s32.totalorder %s20, 1
      %p148 = por %p146, %p147
      %p149 = scmp.ne.s32.totalorder %s138, %s139
      %p150 = scmp.eq.s32.totalorder %s20, 0
      %p151 = por %p149, %p150
      %p152 = scmp.ne.s32.totalorder %s138, %s139
      %p153 = scmp.eq.s32.totalorder %s21, 1
      %p154 = por %p152, %p153
      %p156 = scmp.ne.s32.totalorder %s139, %s155
      %p157 = scmp.eq.s32.totalorder %s21, 0
      %p158 = por %p156, %p157
      %s159 = ssub.s32 %s15, %s22
      %p160 = scmp.eq.s32.totalorder %s159, 0
      %s162 = sadd.s32 %s161, 1
      %s163 = scalar_select %p160, %s161, %s162
      %p166 = pneg %p160
      %p167 = scmp.eq.s32.totalorder %s15, 1
      %p168 = por %p166, %p167
      %p169 = scmp.ne.s32.totalorder %s161, %s164
      %p170 = scmp.eq.s32.totalorder %s15, 0
      %p171 = por %p169, %p170
      %p172 = scmp.ne.s32.totalorder %s161, %s164
      %p173 = scmp.eq.s32.totalorder %s20, 1
      %p174 = por %p172, %p173
      %p175 = scmp.ne.s32.totalorder %s164, %s165
      %p176 = scmp.eq.s32.totalorder %s20, 0
      %p177 = por %p175, %p176
      %p178 = scmp.ne.s32.totalorder %s164, %s165
      %p179 = scmp.eq.s32.totalorder %s21, 1
      %p180 = por %p178, %p179
      %p182 = scmp.ne.s32.totalorder %s165, %s181
      %p183 = scmp.eq.s32.totalorder %s21, 0
      %p184 = por %p182, %p183
      %s185 = ssub.s32 %s15, %s22
      %p186 = scmp.eq.s32.totalorder %s185, 0
      %s188 = sadd.s32 %s187, 1
      %s189 = scalar_select %p186, %s187, %s188
      %p192 = pneg %p186
      %p193 = scmp.eq.s32.totalorder %s15, 1
      %p194 = por %p192, %p193
      %p195 = scmp.ne.s32.totalorder %s187, %s190
      %p196 = scmp.eq.s32.totalorder %s15, 0
      %p197 = por %p195, %p196
      %p198 = scmp.ne.s32.totalorder %s187, %s190
      %p199 = scmp.eq.s32.totalorder %s20, 1
      %p200 = por %p198, %p199
      %p201 = scmp.ne.s32.totalorder %s190, %s191
      %p202 = scmp.eq.s32.totalorder %s20, 0
      %p203 = por %p201, %p202
      %p204 = scmp.ne.s32.totalorder %s190, %s191
      %p205 = scmp.eq.s32.totalorder %s21, 1
      %p206 = por %p204, %p205
      %p208 = scmp.ne.s32.totalorder %s191, %s207
      %p209 = scmp.eq.s32.totalorder %s21, 0
      %p210 = por %p208, %p209
      %s212 = sadd.s32 %s211, 1
      %p215 = scmp.eq.s32.totalorder %s15, 1
      %p216 = scmp.ne.s32.totalorder %s211, %s213
      %p217 = scmp.eq.s32.totalorder %s15, 0
      %p218 = por %p216, %p217
      %p219 = scmp.ne.s32.totalorder %s211, %s213
      %p220 = scmp.eq.s32.totalorder %s20, 1
      %p221 = por %p219, %p220
      %p222 = scmp.ne.s32.totalorder %s213, %s214
      %p223 = scmp.eq.s32.totalorder %s20, 0
      %p224 = por %p222, %p223
      %p225 = scmp.ne.s32.totalorder %s213, %s214
      %p226 = scmp.eq.s32.totalorder %s21, 1
      %p227 = por %p225, %p226
      %p229 = scmp.ne.s32.totalorder %s214, %s228
      %p230 = scmp.eq.s32.totalorder %s21, 0
      %p231 = por %p229, %p230
      %p232 = scmp.le.s32.totalorder 1, %s15
      %p233 = scmp.lt.s32.totalorder %s15, 3
      %p234 = pnand %p232, %p233
      %p235 = pneg %p234
      // Predicated region
      $region9: #{tpu_custom_call.1} parent=5 // pred_check
        _
      $region10: #{tpu_custom_call.1} parent=5 // pred_check_branch
        %237 = sbr.rel (%p234) target = $region12
      $region11: #{tpu_custom_call.1} parent=5 // pred_region
        %s238 = ssub.s32 %s15, 1
        // Predicated region
        $region13: #{tpu_custom_call.1} parent=11 // pred_check
          %p239 = pneg %p36
        $region14: #{tpu_custom_call.1} parent=11 // pred_check_branch
          %241 = sbr.rel (%p239) target = $region16
        $region15: #{tpu_custom_call.1} parent=11 // pred_region
          _
        $region16: #{tpu_custom_call.1} parent=11 // pred_fallthru
          _
        // Predicated region
        $region17: #{tpu_custom_call.1} parent=11 // pred_check
          %p242 = pneg %p57
        $region18: #{tpu_custom_call.1} parent=11 // pred_check_branch
          %244 = sbr.rel (%p242) target = $region20
        $region19: #{tpu_custom_call.1} parent=11 // pred_region
          _
        $region20: #{tpu_custom_call.1} parent=11 // pred_fallthru
          _
        // Predicated region
        $region21: #{tpu_custom_call.1} parent=11 // pred_check
          %p245 = pneg %p78
        $region22: #{tpu_custom_call.1} parent=11 // pred_check_branch
          %247 = sbr.rel (%p245) target = $region24
        $region23: #{tpu_custom_call.1} parent=11 // pred_region
          _
        $region24: #{tpu_custom_call.1} parent=11 // pred_fallthru
          _
        // Predicated region
        $region25: #{tpu_custom_call.1} parent=11 // pred_check
          %p248 = pneg %p99
        $region26: #{tpu_custom_call.1} parent=11 // pred_check_branch
          %250 = sbr.rel (%p248) target = $region28
        $region27: #{tpu_custom_call.1} parent=11 // pred_region
          _
        $region28: #{tpu_custom_call.1} parent=11 // pred_fallthru
          _
      $region12: #{tpu_custom_call.1} parent=5 // pred_fallthru
        _
      %p251 = scmp.lt.s32.totalorder %s15, 2
      // Predicated region
      $region29: #{tpu_custom_call.1} parent=5 // pred_check
        %p252 = pneg %p251
      $region30: #{tpu_custom_call.1} parent=5 // pred_check_branch
        %254 = sbr.rel (%p252) target = $region32
      $region31: #{tpu_custom_call.1} parent=5 // pred_region
        // Predicated region
        $region33: #{tpu_custom_call.1} parent=31 // pred_check
          %p255 = pneg %p119
        $region34: #{tpu_custom_call.1} parent=31 // pred_check_branch
          %257 = sbr.rel (%p255) target = $region36
        $region35: #{tpu_custom_call.1} parent=31 // pred_region
          %p258 = scmp.lt.s32.totalorder %s15, 1
          %s259 = scalar_select %p258, %s15, 1
          %s260 = smul.addr %s259, 32
          %s261 = smul.addr %s260, 8
          %s262 = scalar_lea.vmem %s4, %s261
        $region36: #{tpu_custom_call.1} parent=31 // pred_fallthru
          _
        // Predicated region
        $region37: #{tpu_custom_call.1} parent=31 // pred_check
          %p263 = pneg %p145
        $region38: #{tpu_custom_call.1} parent=31 // pred_check_branch
          %265 = sbr.rel (%p263) target = $region40
        $region39: #{tpu_custom_call.1} parent=31 // pred_region
          %p266 = scmp.lt.s32.totalorder %s15, 1
          %s267 = scalar_select %p266, %s15, 1
          %s268 = smul.addr %s267, 4
          %s269 = smul.addr %s268, 8
          %s270 = scalar_lea.vmem %s5, %s269
        $region40: #{tpu_custom_call.1} parent=31 // pred_fallthru
          _
        // Predicated region
        $region41: #{tpu_custom_call.1} parent=31 // pred_check
          %p271 = pneg %p171
        $region42: #{tpu_custom_call.1} parent=31 // pred_check_branch
          %273 = sbr.rel (%p271) target = $region44
        $region43: #{tpu_custom_call.1} parent=31 // pred_region
          %p274 = scmp.lt.s32.totalorder %s15, 1
          %s275 = scalar_select %p274, %s15, 1
          %s276 = smul.addr %s275, 16
          %s277 = smul.addr %s276, 8
          %s278 = scalar_lea.vmem %s6, %s277
        $region44: #{tpu_custom_call.1} parent=31 // pred_fallthru
          _
        // Predicated region
        $region45: #{tpu_custom_call.1} parent=31 // pred_check
          %p279 = pneg %p197
        $region46: #{tpu_custom_call.1} parent=31 // pred_check_branch
          %281 = sbr.rel (%p279) target = $region48
        $region47: #{tpu_custom_call.1} parent=31 // pred_region
          %p282 = scmp.lt.s32.totalorder %s15, 1
          %s283 = scalar_select %p282, %s15, 1
          %s284 = scalar_lea.vmem %s7, %s283
        $region48: #{tpu_custom_call.1} parent=31 // pred_fallthru
          _
      $region32: #{tpu_custom_call.1} parent=5 // pred_fallthru
        _
      %p285 = scmp.le.s32.totalorder 1, %s15
      %p286 = scmp.lt.s32.totalorder %s15, 3
      %p287 = pnand %p285, %p286
      %p288 = pneg %p287
      // Predicated region
      $region49: #{tpu_custom_call.1} parent=5 // pred_check
        _
      $region50: #{tpu_custom_call.1} parent=5 // pred_check_branch
        %290 = sbr.rel (%p287) target = $region52
      $region51: #{tpu_custom_call.1} parent=5 // pred_region
        %s291 = ssub.s32 %s15, 1
        %p292 = pneg %p36
        %p293 = pneg %p33
        %p294 = pneg %p57
        %p295 = pneg %p54
        %p296 = pneg %p78
        %p297 = pneg %p75
        %p298 = pneg %p99
        %p299 = pneg %p96
        %p300 = scmp.lt.s32.totalorder %s20, 1
        %s301 = scalar_select %p300, %s20, 1
        %s302 = smul.addr %s301, 32
        %s303 = smul.addr %s302, 8
        %s304 = scalar_lea.vmem %s4, %s303
        %p305 = pneg %p125
        %p306 = pneg %p122
        %p307 = scmp.lt.s32.totalorder %s20, 1
        %s308 = scalar_select %p307, %s20, 1
        %s309 = smul.addr %s308, 4
        %s310 = smul.addr %s309, 8
        %s311 = scalar_lea.vmem %s5, %s310
        %p312 = pneg %p151
        %p313 = pneg %p148
        %p314 = scmp.lt.s32.totalorder %s20, 1
        %s315 = scalar_select %p314, %s20, 1
        %s316 = smul.addr %s315, 16
        %s317 = smul.addr %s316, 8
        %s318 = scalar_lea.vmem %s6, %s317
        %p319 = pneg %p177
        %p320 = pneg %p174
        %p321 = scmp.lt.s32.totalorder %s20, 1
        %s322 = scalar_select %p321, %s20, 1
        %s323 = scalar_lea.vmem %s7, %s322
        %p324 = pneg %p203
        %p325 = pneg %p200
        %p326 = pneg %p224
        %p327 = pneg %p221
        %p328 = scmp.lt.s32.totalorder %s20, 1
        %s329 = scalar_select %p328, %s20, 1
        %s330 = smul.addr %s329, 32
        %s331 = smul.addr %s330, 8
        %s332 = scalar_lea.vmem %s4, %s331
        %p333 = scmp.lt.s32.totalorder %s20, 1
        %s334 = scalar_select %p333, %s20, 1
        %s335 = smul.addr %s334, 4
        %s336 = smul.addr %s335, 8
        %s337 = scalar_lea.vmem %s5, %s336
        %p338 = scmp.lt.s32.totalorder %s20, 1
        %s339 = scalar_select %p338, %s20, 1
        %s340 = smul.addr %s339, 16
        %s341 = smul.addr %s340, 8
        %s342 = scalar_lea.vmem %s6, %s341
        %p343 = scmp.lt.s32.totalorder %s20, 1
        %s344 = scalar_select %p343, %s20, 1
        %s345 = scalar_lea.vmem %s7, %s344
        %p346 = scmp.eq.s32.totalorder %s20, 0
        // Predicated region
        $region53: #{tpu_custom_call.1} parent=51 // pred_check
          %p347 = pneg %p346
        $region54: #{tpu_custom_call.1} parent=51 // pred_check_branch
          %349 = sbr.rel (%p347) target = $region56
        $region55: #{tpu_custom_call.1} parent=51 // pred_region
          %v350 = vld [vmem:[%s0] sm:$0xff]
          %v351 = vld [vmem:[%s0 + $0x8] sm:$0xff]
          %352 = vst [vmem:[#allocation2] sm:$0xff] %v350
          %353 = vst [vmem:[#allocation2 + $0x8] sm:$0xff] %v351
          %v354 = vld [vmem:[%s1] sm:$0x3]
          %vm355 = vcmp.gt.f32.partialorder %v354, 0.5
          %v356 = vsel %vm355, 1, 0
          %v357 = vrot.slane %v356, 1
          %vm358 = vcmp.ne.s32.totalorder %v357, 0
          %v359 = vsel %vm358, 1, 0
          %v360 = vperm.slane %v356, 0
          %v361 = vperm.slane %v359, 0
          %vm362 = vcmp.eq.s32.totalorder %v360, 1
          %vm363 = vcmp.eq.s32.totalorder %v361, 1
          %v364 = vlaneseq
          %v365 = vshrl.u32 %v364, 7
          %v366 = vlaneseq
          %v367 = vand.u32 %v366, 127
          %vm368 = vcmp.ge.s32.totalorder %v365, %v367
          %v369 = vsel %vm368, 1, 0
          %vm370 = vcmp.eq.s32.totalorder %v369, 1
          %vm371 = vmand %vm362, %vm370
          %vm372 = vmand %vm363, %vm370
          %v373 = vsel %vm371, 0.0, -1e+30
          %v374 = vsel %vm372, 0.0, -1e+30
          %vm375 = vcmask 64512
          %376 = vst.msk [vmem:[#allocation3] sm:$0xff] %vm375, %v373
          %377 = vst.msk [vmem:[#allocation3 + $0x8] sm:$0xff] %vm375, %v374
          %378 = vst.msk [vmem:[#allocation3 + $0x10] sm:$0xff] %vm375, %v373
          %379 = vst.msk [vmem:[#allocation3 + $0x18] sm:$0xff] %vm375, %v374
          %380 = vst.msk [vmem:[#allocation3 + $0x20] sm:$0xff] %vm375, %v373
          %381 = vst.msk [vmem:[#allocation3 + $0x28] sm:$0xff] %vm375, %v374
          %382 = vst.msk [vmem:[#allocation3 + $0x30] sm:$0xff] %vm375, %v373
          %383 = vst.msk [vmem:[#allocation3 + $0x38] sm:$0xff] %vm375, %v374
        $region56: #{tpu_custom_call.1} parent=51 // pred_fallthru
          _
        %v384 = vld [vmem:[#allocation2] sm:$0xff]
        %v385 = vld [vmem:[#allocation2 + $0x8] sm:$0xff]
        %v386 = vld [vmem:[%s332] sm:$0xff]
        %v387 = vld [vmem:[%s332 + $0x8] sm:$0xff]
        %v388 = vld [vmem:[%s332 + $0x10] sm:$0xff]
        %v389 = vld [vmem:[%s332 + $0x18] sm:$0xff]
        %v390 = vld [vmem:[%s332 + $0x20] sm:$0xff]
        %v391 = vld [vmem:[%s332 + $0x28] sm:$0xff]
        %v392 = vld [vmem:[%s332 + $0x30] sm:$0xff]
        %v393 = vld [vmem:[%s332 + $0x38] sm:$0xff]
        %v394 = vld [vmem:[%s332 + $0x40] sm:$0xff]
        %v395 = vld [vmem:[%s332 + $0x48] sm:$0xff]
        %v396 = vld [vmem:[%s332 + $0x50] sm:$0xff]
        %v397 = vld [vmem:[%s332 + $0x58] sm:$0xff]
        %v398 = vld [vmem:[%s332 + $0x60] sm:$0xff]
        %v399 = vld [vmem:[%s332 + $0x68] sm:$0xff]
        %v400 = vld [vmem:[%s332 + $0x70] sm:$0xff]
        %v401 = vld [vmem:[%s332 + $0x78] sm:$0xff]
        %v402 = vld [vmem:[%s332 + $0x80] sm:$0xff]
        %v403 = vld [vmem:[%s332 + $0x88] sm:$0xff]
        %v404 = vld [vmem:[%s332 + $0x90] sm:$0xff]
        %v405 = vld [vmem:[%s332 + $0x98] sm:$0xff]
        %v406 = vld [vmem:[%s332 + $0xa0] sm:$0xff]
        %v407 = vld [vmem:[%s332 + $0xa8] sm:$0xff]
        %v408 = vld [vmem:[%s332 + $0xb0] sm:$0xff]
        %v409 = vld [vmem:[%s332 + $0xb8] sm:$0xff]
        %v410 = vld [vmem:[%s332 + $0xc0] sm:$0xff]
        %v411 = vld [vmem:[%s332 + $0xc8] sm:$0xff]
        %v412 = vld [vmem:[%s332 + $0xd0] sm:$0xff]
        %v413 = vld [vmem:[%s332 + $0xd8] sm:$0xff]
        %v414 = vld [vmem:[%s332 + $0xe0] sm:$0xff]
        %v415 = vld [vmem:[%s332 + $0xe8] sm:$0xff]
        %v416 = vld [vmem:[%s332 + $0xf0] sm:$0xff]
        %v417 = vld [vmem:[%s332 + $0xf8] sm:$0xff]
        %418 = vmatpush.msra.mxu0 %v416
        %419 = vmatpush.msra.mxu0 %v414
        %420 = vmatpush.msra.mxu0 %v412
        %421 = vmatpush.msra.mxu0 %v410
        %422 = vmatpush.msra.mxu0 %v408
        %423 = vmatpush.msra.mxu0 %v406
        %424 = vmatpush.msra.mxu0 %v404
        %425 = vmatpush.msra.mxu0 %v402
        %426 = vmatpush.msra.mxu0 %v400
        %427 = vmatpush.msra.mxu0 %v398
        %428 = vmatpush.msra.mxu0 %v396
        %429 = vmatpush.msra.mxu0 %v394
        %430 = vmatpush.msra.mxu0 %v392
        %431 = vmatpush.msra.mxu0 %v390
        %432 = vmatpush.msra.mxu0 %v388
        %433 = vmatpush.msra.mxu0 %v386
        %434 = vmatmul.f32.gmra.mxu0 %v384
        %v435 = vpop.f32.mrf.mxu0
        %v436 = vadd.f32 0.0, %v435
        %437 = vmatmul.f32.gmra.mxu0 %v385
        %v438 = vpop.f32.mrf.mxu0
        %v439 = vadd.f32 0.0, %v438
        %440 = vdwg.mxu0
        %441 = vmatpush.msra.mxu0 %v417
        %442 = vmatpush.msra.mxu0 %v415
        %443 = vmatpush.msra.mxu0 %v413
        %444 = vmatpush.msra.mxu0 %v411
        %445 = vmatpush.msra.mxu0 %v409
        %446 = vmatpush.msra.mxu0 %v407
        %447 = vmatpush.msra.mxu0 %v405
        %448 = vmatpush.msra.mxu0 %v403
        %449 = vmatpush.msra.mxu0 %v401
        %450 = vmatpush.msra.mxu0 %v399
        %451 = vmatpush.msra.mxu0 %v397
        %452 = vmatpush.msra.mxu0 %v395
        %453 = vmatpush.msra.mxu0 %v393
        %454 = vmatpush.msra.mxu0 %v391
        %455 = vmatpush.msra.mxu0 %v389
        %456 = vmatpush.msra.mxu0 %v387
        %457 = vmatmul.f32.gmra.mxu0 %v384
        %v458 = vpop.f32.mrf.mxu0
        %v459 = vadd.f32 0.0, %v458
        %460 = vmatmul.f32.gmra.mxu0 %v385
        %v461 = vpop.f32.mrf.mxu0
        %v462 = vadd.f32 0.0, %v461
        %463 = vdwg.mxu0
        %v464 = vld [vmem:[%s2] sm:$0xff]
        %v465 = vld [vmem:[%s2 + $0x8] sm:$0xff]
        %v466 = vld [vmem:[%s3] sm:$0xff]
        %v467 = vld [vmem:[%s3 + $0x8] sm:$0xff]
        %v468 = vmul.f32 %v436, %v464
        %v469 = vmul.f32 %v439, %v465
        %472 = vrot.lane.b32.xlu0 %v466, 32
        %v473 = vpop.permute.xlu0 %472
        %474 = vrot.lane.b32.xlu0 %v467, 32
        %v475 = vpop.permute.xlu0 %474
        %v478 = vmul.f32 %v436, %v473
        %v479 = vmul.f32 %v439, %v475
        %482 = vrot.lane.b32.xlu0 %v478, 96
        %v483 = vpop.permute.xlu0 %482
        %484 = vrot.lane.b32.xlu0 %v479, 96
        %v485 = vpop.permute.xlu0 %484
        %v488 = vadd.f32 %v468, %v483
        %v489 = vadd.f32 %v469, %v485
        %492 = vrot.lane.b32.xlu0 %v464, 64
        %v493 = vpop.permute.xlu0 %492
        %494 = vrot.lane.b32.xlu0 %v465, 64
        %v495 = vpop.permute.xlu0 %494
        %v498 = vmul.f32 %v436, %v493
        %v499 = vmul.f32 %v439, %v495
        %500 = vrot.lane.b32.xlu0 %v466, 96
        %v501 = vpop.permute.xlu0 %500
        %502 = vrot.lane.b32.xlu0 %v467, 96
        %v503 = vpop.permute.xlu0 %502
        %v506 = vmul.f32 %v436, %v501
        %v507 = vmul.f32 %v439, %v503
        %510 = vrot.lane.b32.xlu0 %v506, 96
        %v511 = vpop.permute.xlu0 %510
        %512 = vrot.lane.b32.xlu0 %v507, 96
        %v513 = vpop.permute.xlu0 %512
        %v516 = vadd.f32 %v498, %v511
        %v517 = vadd.f32 %v499, %v513
        %520 = vrot.lane.b32.xlu0 %v488, 120
        %v521 = vpop.permute.xlu0 %520
        %522 = vrot.lane.b32.xlu0 %v489, 120
        %v523 = vpop.permute.xlu0 %522
        %524 = vrot.lane.b32.xlu0 %v488, 112
        %v525 = vpop.permute.xlu0 %524
        %526 = vrot.lane.b32.xlu0 %v489, 112
        %v527 = vpop.permute.xlu0 %526
        %528 = vrot.lane.b32.xlu0 %v488, 104
        %v529 = vpop.permute.xlu0 %528
        %530 = vrot.lane.b32.xlu0 %v489, 104
        %v531 = vpop.permute.xlu0 %530
        %534 = vrot.lane.b32.xlu0 %v516, 120
        %v535 = vpop.permute.xlu0 %534
        %536 = vrot.lane.b32.xlu0 %v517, 120
        %v537 = vpop.permute.xlu0 %536
        %538 = vrot.lane.b32.xlu0 %v516, 112
        %v539 = vpop.permute.xlu0 %538
        %540 = vrot.lane.b32.xlu0 %v517, 112
        %v541 = vpop.permute.xlu0 %540
        %542 = vrot.lane.b32.xlu0 %v516, 104
        %v543 = vpop.permute.xlu0 %542
        %544 = vrot.lane.b32.xlu0 %v517, 104
        %v545 = vpop.permute.xlu0 %544
        %548 = vrot.lane.b32.xlu0 %v459, 120
        %v549 = vpop.permute.xlu0 %548
        %550 = vrot.lane.b32.xlu0 %v462, 120
        %v551 = vpop.permute.xlu0 %550
        %554 = vrot.lane.b32.xlu0 %v459, 112
        %v555 = vpop.permute.xlu0 %554
        %556 = vrot.lane.b32.xlu0 %v462, 112
        %v557 = vpop.permute.xlu0 %556
        %560 = vrot.lane.b32.xlu0 %v459, 104
        %v561 = vpop.permute.xlu0 %560
        %562 = vrot.lane.b32.xlu0 %v462, 104
        %v563 = vpop.permute.xlu0 %562
        %v566 = vld [vmem:[#allocation3] sm:$0xff]
        %v567 = vld [vmem:[#allocation3 + $0x8] sm:$0xff]
        %v568 = vld [vmem:[#allocation3 + $0x10] sm:$0xff]
        %v569 = vld [vmem:[#allocation3 + $0x18] sm:$0xff]
        %v570 = vld [vmem:[#allocation3 + $0x20] sm:$0xff]
        %v571 = vld [vmem:[#allocation3 + $0x28] sm:$0xff]
        %v572 = vld [vmem:[#allocation3 + $0x30] sm:$0xff]
        %v573 = vld [vmem:[#allocation3 + $0x38] sm:$0xff]
        %574 = vrot.lane.b32.xlu0 %v516, 64
        %v575 = vpop.permute.xlu0 %574
        %vm576 = vcmask 64512
        %v577 = vsel %vm576, %v488, 0
        %v579 = vsel %vm576, %v575, 0
        %581 = vmatpush.xpose.msra.mxu0 0.0
        %582 = vmatpush.xpose.msra.mxu0 0.0
        %583 = vmatpush.xpose.msra.mxu0 0.0
        %584 = vmatpush.xpose.msra.mxu0 0.0
        %585 = vmatpush.xpose.msra.mxu0 0.0
        %586 = vmatpush.xpose.msra.mxu0 0.0
        %587 = vmatpush.xpose.msra.mxu0 0.0
        %588 = vmatpush.xpose.msra.mxu0 0.0
        %589 = vmatpush.xpose.msra.mxu0 0.0
        %590 = vmatpush.xpose.msra.mxu0 0.0
        %591 = vmatpush.xpose.msra.mxu0 0.0
        %592 = vmatpush.xpose.msra.mxu0 0.0
        %593 = vmatpush.xpose.msra.mxu0 0.0
        %594 = vmatpush.xpose.msra.mxu0 0.0
        %595 = vmatpush.xpose.msra.mxu0 0.0
        %596 = vmatpush.xpose.msra.mxu0 %v579
        %597 = vmatmul.f32.gmra.mxu0 %v577
        %v598 = vpop.f32.mrf.mxu0
        %v599 = vadd.f32 %v566, %v598
        %600 = vdwg.mxu0
        %601 = vrot.lane.b32.xlu0 %v517, 64
        %v602 = vpop.permute.xlu0 %601
        %v603 = vsel %vm576, %v489, 0
        %v605 = vsel %vm576, %v602, 0
        %607 = vmatpush.xpose.msra.mxu0 0.0
        %608 = vmatpush.xpose.msra.mxu0 0.0
        %609 = vmatpush.xpose.msra.mxu0 0.0
        %610 = vmatpush.xpose.msra.mxu0 0.0
        %611 = vmatpush.xpose.msra.mxu0 0.0
        %612 = vmatpush.xpose.msra.mxu0 0.0
        %613 = vmatpush.xpose.msra.mxu0 0.0
        %614 = vmatpush.xpose.msra.mxu0 0.0
        %615 = vmatpush.xpose.msra.mxu0 0.0
        %616 = vmatpush.xpose.msra.mxu0 0.0
        %617 = vmatpush.xpose.msra.mxu0 0.0
        %618 = vmatpush.xpose.msra.mxu0 0.0
        %619 = vmatpush.xpose.msra.mxu0 0.0
        %620 = vmatpush.xpose.msra.mxu0 0.0
        %621 = vmatpush.xpose.msra.mxu0 0.0
        %622 = vmatpush.xpose.msra.mxu0 %v605
        %623 = vmatmul.f32.gmra.mxu0 %v603
        %v624 = vpop.f32.mrf.mxu0
        %v625 = vadd.f32 %v567, %v624
        %626 = vdwg.mxu0
        %627 = vrot.lane.b32.xlu0 %v535, 64
        %v628 = vpop.permute.xlu0 %627
        %v629 = vsel %vm576, %v521, 0
        %v631 = vsel %vm576, %v628, 0
        %633 = vmatpush.xpose.msra.mxu0 0.0
        %634 = vmatpush.xpose.msra.mxu0 0.0
        %635 = vmatpush.xpose.msra.mxu0 0.0
        %636 = vmatpush.xpose.msra.mxu0 0.0
        %637 = vmatpush.xpose.msra.mxu0 0.0
        %638 = vmatpush.xpose.msra.mxu0 0.0
        %639 = vmatpush.xpose.msra.mxu0 0.0
        %640 = vmatpush.xpose.msra.mxu0 0.0
        %641 = vmatpush.xpose.msra.mxu0 0.0
        %642 = vmatpush.xpose.msra.mxu0 0.0
        %643 = vmatpush.xpose.msra.mxu0 0.0
        %644 = vmatpush.xpose.msra.mxu0 0.0
        %645 = vmatpush.xpose.msra.mxu0 0.0
        %646 = vmatpush.xpose.msra.mxu0 0.0
        %647 = vmatpush.xpose.msra.mxu0 0.0
        %648 = vmatpush.xpose.msra.mxu0 %v631
        %649 = vmatmul.f32.gmra.mxu0 %v629
        %v650 = vpop.f32.mrf.mxu0
        %v651 = vadd.f32 %v568, %v650
        %652 = vdwg.mxu0
        %653 = vrot.lane.b32.xlu0 %v537, 64
        %v654 = vpop.permute.xlu0 %653
        %v655 = vsel %vm576, %v523, 0
        %v657 = vsel %vm576, %v654, 0
        %659 = vmatpush.xpose.msra.mxu0 0.0
        %660 = vmatpush.xpose.msra.mxu0 0.0
        %661 = vmatpush.xpose.msra.mxu0 0.0
        %662 = vmatpush.xpose.msra.mxu0 0.0
        %663 = vmatpush.xpose.msra.mxu0 0.0
        %664 = vmatpush.xpose.msra.mxu0 0.0
        %665 = vmatpush.xpose.msra.mxu0 0.0
        %666 = vmatpush.xpose.msra.mxu0 0.0
        %667 = vmatpush.xpose.msra.mxu0 0.0
        %668 = vmatpush.xpose.msra.mxu0 0.0
        %669 = vmatpush.xpose.msra.mxu0 0.0
        %670 = vmatpush.xpose.msra.mxu0 0.0
        %671 = vmatpush.xpose.msra.mxu0 0.0
        %672 = vmatpush.xpose.msra.mxu0 0.0
        %673 = vmatpush.xpose.msra.mxu0 0.0
        %674 = vmatpush.xpose.msra.mxu0 %v657
        %675 = vmatmul.f32.gmra.mxu0 %v655
        %v676 = vpop.f32.mrf.mxu0
        %v677 = vadd.f32 %v569, %v676
        %678 = vdwg.mxu0
        %679 = vrot.lane.b32.xlu0 %v539, 64
        %v680 = vpop.permute.xlu0 %679
        %v681 = vsel %vm576, %v525, 0
        %v683 = vsel %vm576, %v680, 0
        %685 = vmatpush.xpose.msra.mxu0 0.0
        %686 = vmatpush.xpose.msra.mxu0 0.0
        %687 = vmatpush.xpose.msra.mxu0 0.0
        %688 = vmatpush.xpose.msra.mxu0 0.0
        %689 = vmatpush.xpose.msra.mxu0 0.0
        %690 = vmatpush.xpose.msra.mxu0 0.0
        %691 = vmatpush.xpose.msra.mxu0 0.0
        %692 = vmatpush.xpose.msra.mxu0 0.0
        %693 = vmatpush.xpose.msra.mxu0 0.0
        %694 = vmatpush.xpose.msra.mxu0 0.0
        %695 = vmatpush.xpose.msra.mxu0 0.0
        %696 = vmatpush.xpose.msra.mxu0 0.0
        %697 = vmatpush.xpose.msra.mxu0 0.0
        %698 = vmatpush.xpose.msra.mxu0 0.0
        %699 = vmatpush.xpose.msra.mxu0 0.0
        %700 = vmatpush.xpose.msra.mxu0 %v683
        %701 = vmatmul.f32.gmra.mxu0 %v681
        %v702 = vpop.f32.mrf.mxu0
        %v703 = vadd.f32 %v570, %v702
        %704 = vdwg.mxu0
        %705 = vrot.lane.b32.xlu0 %v541, 64
        %v706 = vpop.permute.xlu0 %705
        %v707 = vsel %vm576, %v527, 0
        %v709 = vsel %vm576, %v706, 0
        %711 = vmatpush.xpose.msra.mxu0 0.0
        %712 = vmatpush.xpose.msra.mxu0 0.0
        %713 = vmatpush.xpose.msra.mxu0 0.0
        %714 = vmatpush.xpose.msra.mxu0 0.0
        %715 = vmatpush.xpose.msra.mxu0 0.0
        %716 = vmatpush.xpose.msra.mxu0 0.0
        %717 = vmatpush.xpose.msra.mxu0 0.0
        %718 = vmatpush.xpose.msra.mxu0 0.0
        %719 = vmatpush.xpose.msra.mxu0 0.0
        %720 = vmatpush.xpose.msra.mxu0 0.0
        %721 = vmatpush.xpose.msra.mxu0 0.0
        %722 = vmatpush.xpose.msra.mxu0 0.0
        %723 = vmatpush.xpose.msra.mxu0 0.0
        %724 = vmatpush.xpose.msra.mxu0 0.0
        %725 = vmatpush.xpose.msra.mxu0 0.0
        %726 = vmatpush.xpose.msra.mxu0 %v709
        %727 = vmatmul.f32.gmra.mxu0 %v707
        %v728 = vpop.f32.mrf.mxu0
        %v729 = vadd.f32 %v571, %v728
        %730 = vdwg.mxu0
        %731 = vrot.lane.b32.xlu0 %v543, 64
        %v732 = vpop.permute.xlu0 %731
        %v733 = vsel %vm576, %v529, 0
        %v735 = vsel %vm576, %v732, 0
        %737 = vmatpush.xpose.msra.mxu0 0.0
        %738 = vmatpush.xpose.msra.mxu0 0.0
        %739 = vmatpush.xpose.msra.mxu0 0.0
        %740 = vmatpush.xpose.msra.mxu0 0.0
        %741 = vmatpush.xpose.msra.mxu0 0.0
        %742 = vmatpush.xpose.msra.mxu0 0.0
        %743 = vmatpush.xpose.msra.mxu0 0.0
        %744 = vmatpush.xpose.msra.mxu0 0.0
        %745 = vmatpush.xpose.msra.mxu0 0.0
        %746 = vmatpush.xpose.msra.mxu0 0.0
        %747 = vmatpush.xpose.msra.mxu0 0.0
        %748 = vmatpush.xpose.msra.mxu0 0.0
        %749 = vmatpush.xpose.msra.mxu0 0.0
        %750 = vmatpush.xpose.msra.mxu0 0.0
        %751 = vmatpush.xpose.msra.mxu0 0.0
        %752 = vmatpush.xpose.msra.mxu0 %v735
        %753 = vmatmul.f32.gmra.mxu0 %v733
        %v754 = vpop.f32.mrf.mxu0
        %v755 = vadd.f32 %v572, %v754
        %756 = vdwg.mxu0
        %757 = vrot.lane.b32.xlu0 %v545, 64
        %v758 = vpop.permute.xlu0 %757
        %v759 = vsel %vm576, %v531, 0
        %v761 = vsel %vm576, %v758, 0
        %763 = vmatpush.xpose.msra.mxu0 0.0
        %764 = vmatpush.xpose.msra.mxu0 0.0
        %765 = vmatpush.xpose.msra.mxu0 0.0
        %766 = vmatpush.xpose.msra.mxu0 0.0
        %767 = vmatpush.xpose.msra.mxu0 0.0
        %768 = vmatpush.xpose.msra.mxu0 0.0
        %769 = vmatpush.xpose.msra.mxu0 0.0
        %770 = vmatpush.xpose.msra.mxu0 0.0
        %771 = vmatpush.xpose.msra.mxu0 0.0
        %772 = vmatpush.xpose.msra.mxu0 0.0
        %773 = vmatpush.xpose.msra.mxu0 0.0
        %774 = vmatpush.xpose.msra.mxu0 0.0
        %775 = vmatpush.xpose.msra.mxu0 0.0
        %776 = vmatpush.xpose.msra.mxu0 0.0
        %777 = vmatpush.xpose.msra.mxu0 0.0
        %778 = vmatpush.xpose.msra.mxu0 %v761
        %779 = vmatmul.f32.gmra.mxu0 %v759
        %v780 = vpop.f32.mrf.mxu0
        %v781 = vadd.f32 %v573, %v780
        %782 = vdwg.mxu0
        %v783 = vsel %vm576, %v599, -inf
        %784 = vmax.xlane.f32.xlu0 %v783
        %v785 = vpop.xlane.xlu0 %784
        %v786 = vsel %vm576, %v625, -inf
        %787 = vmax.xlane.f32.xlu0 %v786
        %v788 = vpop.xlane.xlu0 %787
        %v789 = vsel %vm576, %v651, -inf
        %790 = vmax.xlane.f32.xlu0 %v789
        %v791 = vpop.xlane.xlu0 %790
        %v792 = vsel %vm576, %v677, -inf
        %793 = vmax.xlane.f32.xlu0 %v792
        %v794 = vpop.xlane.xlu0 %793
        %v795 = vsel %vm576, %v703, -inf
        %796 = vmax.xlane.f32.xlu0 %v795
        %v797 = vpop.xlane.xlu0 %796
        %v798 = vsel %vm576, %v729, -inf
        %799 = vmax.xlane.f32.xlu0 %v798
        %v800 = vpop.xlane.xlu0 %799
        %v801 = vsel %vm576, %v755, -inf
        %802 = vmax.xlane.f32.xlu0 %v801
        %v803 = vpop.xlane.xlu0 %802
        %v804 = vsel %vm576, %v781, -inf
        %805 = vmax.xlane.f32.xlu0 %v804
        %v806 = vpop.xlane.xlu0 %805
        %v807 = vsub.f32 %v599, %v785
        %v808 = vsub.f32 %v625, %v788
        %v809 = vsub.f32 %v651, %v791
        %v810 = vsub.f32 %v677, %v794
        %v811 = vsub.f32 %v703, %v797
        %v812 = vsub.f32 %v729, %v800
        %v813 = vsub.f32 %v755, %v803
        %v814 = vsub.f32 %v781, %v806
        %v815 = vmul.f32 %v807, 1.442695
        %v816 = vpow.pop %v815
        %v817 = vmul.f32 %v808, 1.442695
        %v818 = vpow.pop %v817
        %v819 = vmul.f32 %v809, 1.442695
        %v820 = vpow.pop %v819
        %v821 = vmul.f32 %v810, 1.442695
        %v822 = vpow.pop %v821
        %v823 = vmul.f32 %v811, 1.442695
        %v824 = vpow.pop %v823
        %v825 = vmul.f32 %v812, 1.442695
        %v826 = vpow.pop %v825
        %v827 = vmul.f32 %v813, 1.442695
        %v828 = vpow.pop %v827
        %v829 = vmul.f32 %v814, 1.442695
        %v830 = vpow.pop %v829
        %v831 = vsel %vm576, %v816, 0.0
        %832 = vadd.xlane.f32.xlu0 %v831
        %v833 = vpop.xlane.xlu0 %832
        %v834 = vsel %vm576, %v818, 0.0
        %835 = vadd.xlane.f32.xlu0 %v834
        %v836 = vpop.xlane.xlu0 %835
        %v837 = vsel %vm576, %v820, 0.0
        %838 = vadd.xlane.f32.xlu0 %v837
        %v839 = vpop.xlane.xlu0 %838
        %v840 = vsel %vm576, %v822, 0.0
        %841 = vadd.xlane.f32.xlu0 %v840
        %v842 = vpop.xlane.xlu0 %841
        %v843 = vsel %vm576, %v824, 0.0
        %844 = vadd.xlane.f32.xlu0 %v843
        %v845 = vpop.xlane.xlu0 %844
        %v846 = vsel %vm576, %v826, 0.0
        %847 = vadd.xlane.f32.xlu0 %v846
        %v848 = vpop.xlane.xlu0 %847
        %v849 = vsel %vm576, %v828, 0.0
        %850 = vadd.xlane.f32.xlu0 %v849
        %v851 = vpop.xlane.xlu0 %850
        %v852 = vsel %vm576, %v830, 0.0
        %853 = vadd.xlane.f32.xlu0 %v852
        %v854 = vpop.xlane.xlu0 %853
        %v855 = vrcp.pop %v833
        %v856 = vmul.f32 %v833, %v855
        %v857 = vsub.f32 1.0, %v856
        %v858 = vmul.f32 %v855, %v857
        %v859 = vadd.f32 %v855, %v858
        %vm860 = vweird.f32 %v833
        %vm861 = vweird.f32 %v855
        %vm862 = vmor %vm860, %vm861
        %v863 = vsel %vm862, %v855, %v859
        %v864 = vand.u32 2147483647, %v833
        %vm865 = vcmp.eq.f32.partialorder %v864, 8.507059e+37
        %v866 = vand.u32 %v833, 2147483648
        %v867 = vor.u32 1.1754944e-38, %v866
        %v868 = vsel %vm865, %v867, %v863
        %v869 = vmul.f32 %v816, %v868
        %v870 = vrcp.pop %v836
        %v871 = vmul.f32 %v836, %v870
        %v872 = vsub.f32 1.0, %v871
        %v873 = vmul.f32 %v870, %v872
        %v874 = vadd.f32 %v870, %v873
        %vm875 = vweird.f32 %v836
        %vm876 = vweird.f32 %v870
        %vm877 = vmor %vm875, %vm876
        %v878 = vsel %vm877, %v870, %v874
        %v879 = vand.u32 2147483647, %v836
        %vm880 = vcmp.eq.f32.partialorder %v879, 8.507059e+37
        %v881 = vand.u32 %v836, 2147483648
        %v882 = vor.u32 1.1754944e-38, %v881
        %v883 = vsel %vm880, %v882, %v878
        %v884 = vmul.f32 %v818, %v883
        %v885 = vrcp.pop %v839
        %v886 = vmul.f32 %v839, %v885
        %v887 = vsub.f32 1.0, %v886
        %v888 = vmul.f32 %v885, %v887
        %v889 = vadd.f32 %v885, %v888
        %vm890 = vweird.f32 %v839
        %vm891 = vweird.f32 %v885
        %vm892 = vmor %vm890, %vm891
        %v893 = vsel %vm892, %v885, %v889
        %v894 = vand.u32 2147483647, %v839
        %vm895 = vcmp.eq.f32.partialorder %v894, 8.507059e+37
        %v896 = vand.u32 %v839, 2147483648
        %v897 = vor.u32 1.1754944e-38, %v896
        %v898 = vsel %vm895, %v897, %v893
        %v899 = vmul.f32 %v820, %v898
        %v900 = vrcp.pop %v842
        %v901 = vmul.f32 %v842, %v900
        %v902 = vsub.f32 1.0, %v901
        %v903 = vmul.f32 %v900, %v902
        %v904 = vadd.f32 %v900, %v903
        %vm905 = vweird.f32 %v842
        %vm906 = vweird.f32 %v900
        %vm907 = vmor %vm905, %vm906
        %v908 = vsel %vm907, %v900, %v904
        %v909 = vand.u32 2147483647, %v842
        %vm910 = vcmp.eq.f32.partialorder %v909, 8.507059e+37
        %v911 = vand.u32 %v842, 2147483648
        %v912 = vor.u32 1.1754944e-38, %v911
        %v913 = vsel %vm910, %v912, %v908
        %v914 = vmul.f32 %v822, %v913
        %v915 = vrcp.pop %v845
        %v916 = vmul.f32 %v845, %v915
        %v917 = vsub.f32 1.0, %v916
        %v918 = vmul.f32 %v915, %v917
        %v919 = vadd.f32 %v915, %v918
        %vm920 = vweird.f32 %v845
        %vm921 = vweird.f32 %v915
        %vm922 = vmor %vm920, %vm921
        %v923 = vsel %vm922, %v915, %v919
        %v924 = vand.u32 2147483647, %v845
        %vm925 = vcmp.eq.f32.partialorder %v924, 8.507059e+37
        %v926 = vand.u32 %v845, 2147483648
        %v927 = vor.u32 1.1754944e-38, %v926
        %v928 = vsel %vm925, %v927, %v923
        %v929 = vmul.f32 %v824, %v928
        %v930 = vrcp.pop %v848
        %v931 = vmul.f32 %v848, %v930
        %v932 = vsub.f32 1.0, %v931
        %v933 = vmul.f32 %v930, %v932
        %v934 = vadd.f32 %v930, %v933
        %vm935 = vweird.f32 %v848
        %vm936 = vweird.f32 %v930
        %vm937 = vmor %vm935, %vm936
        %v938 = vsel %vm937, %v930, %v934
        %v939 = vand.u32 2147483647, %v848
        %vm940 = vcmp.eq.f32.partialorder %v939, 8.507059e+37
        %v941 = vand.u32 %v848, 2147483648
        %v942 = vor.u32 1.1754944e-38, %v941
        %v943 = vsel %vm940, %v942, %v938
        %v944 = vmul.f32 %v826, %v943
        %v945 = vrcp.pop %v851
        %v946 = vmul.f32 %v851, %v945
        %v947 = vsub.f32 1.0, %v946
        %v948 = vmul.f32 %v945, %v947
        %v949 = vadd.f32 %v945, %v948
        %vm950 = vweird.f32 %v851
        %vm951 = vweird.f32 %v945
        %vm952 = vmor %vm950, %vm951
        %v953 = vsel %vm952, %v945, %v949
        %v954 = vand.u32 2147483647, %v851
        %vm955 = vcmp.eq.f32.partialorder %v954, 8.507059e+37
        %v956 = vand.u32 %v851, 2147483648
        %v957 = vor.u32 1.1754944e-38, %v956
        %v958 = vsel %vm955, %v957, %v953
        %v959 = vmul.f32 %v828, %v958
        %v960 = vrcp.pop %v854
        %v961 = vmul.f32 %v854, %v960
        %v962 = vsub.f32 1.0, %v961
        %v963 = vmul.f32 %v960, %v962
        %v964 = vadd.f32 %v960, %v963
        %vm965 = vweird.f32 %v854
        %vm966 = vweird.f32 %v960
        %vm967 = vmor %vm965, %vm966
        %v968 = vsel %vm967, %v960, %v964
        %v969 = vand.u32 2147483647, %v854
        %vm970 = vcmp.eq.f32.partialorder %v969, 8.507059e+37
        %v971 = vand.u32 %v854, 2147483648
        %v972 = vor.u32 1.1754944e-38, %v971
        %v973 = vsel %vm970, %v972, %v968
        %v974 = vmul.f32 %v830, %v973
        %v976 = vsel %vm576, %v869, 0
        %978 = vmatpush.msra.mxu0 0.0
        %979 = vmatpush.msra.mxu0 0.0
        %980 = vmatpush.msra.mxu0 0.0
        %981 = vmatpush.msra.mxu0 0.0
        %982 = vmatpush.msra.mxu0 0.0
        %983 = vmatpush.msra.mxu0 0.0
        %984 = vmatpush.msra.mxu0 0.0
        %985 = vmatpush.msra.mxu0 0.0
        %986 = vmatpush.msra.mxu0 0.0
        %987 = vmatpush.msra.mxu0 0.0
        %988 = vmatpush.msra.mxu0 0.0
        %989 = vmatpush.msra.mxu0 0.0
        %990 = vmatpush.msra.mxu0 0.0
        %991 = vmatpush.msra.mxu0 0.0
        %992 = vmatpush.msra.mxu0 0.0
        %993 = vmatpush.msra.mxu0 %v459
        %994 = vmatmul.f32.gmra.mxu0 %v976
        %v995 = vpop.f32.mrf.mxu0
        %v996 = vadd.f32 0.0, %v995
        %997 = vdwg.mxu0
        %v999 = vsel %vm576, %v884, 0
        %1001 = vmatpush.msra.mxu0 0.0
        %1002 = vmatpush.msra.mxu0 0.0
        %1003 = vmatpush.msra.mxu0 0.0
        %1004 = vmatpush.msra.mxu0 0.0
        %1005 = vmatpush.msra.mxu0 0.0
        %1006 = vmatpush.msra.mxu0 0.0
        %1007 = vmatpush.msra.mxu0 0.0
        %1008 = vmatpush.msra.mxu0 0.0
        %1009 = vmatpush.msra.mxu0 0.0
        %1010 = vmatpush.msra.mxu0 0.0
        %1011 = vmatpush.msra.mxu0 0.0
        %1012 = vmatpush.msra.mxu0 0.0
        %1013 = vmatpush.msra.mxu0 0.0
        %1014 = vmatpush.msra.mxu0 0.0
        %1015 = vmatpush.msra.mxu0 0.0
        %1016 = vmatpush.msra.mxu0 %v462
        %1017 = vmatmul.f32.gmra.mxu0 %v999
        %v1018 = vpop.f32.mrf.mxu0
        %v1019 = vadd.f32 0.0, %v1018
        %1020 = vdwg.mxu0
        %v1022 = vsel %vm576, %v899, 0
        %1024 = vmatpush.msra.mxu0 0.0
        %1025 = vmatpush.msra.mxu0 0.0
        %1026 = vmatpush.msra.mxu0 0.0
        %1027 = vmatpush.msra.mxu0 0.0
        %1028 = vmatpush.msra.mxu0 0.0
        %1029 = vmatpush.msra.mxu0 0.0
        %1030 = vmatpush.msra.mxu0 0.0
        %1031 = vmatpush.msra.mxu0 0.0
        %1032 = vmatpush.msra.mxu0 0.0
        %1033 = vmatpush.msra.mxu0 0.0
        %1034 = vmatpush.msra.mxu0 0.0
        %1035 = vmatpush.msra.mxu0 0.0
        %1036 = vmatpush.msra.mxu0 0.0
        %1037 = vmatpush.msra.mxu0 0.0
        %1038 = vmatpush.msra.mxu0 0.0
        %1039 = vmatpush.msra.mxu0 %v549
        %1040 = vmatmul.f32.gmra.mxu0 %v1022
        %v1041 = vpop.f32.mrf.mxu0
        %v1042 = vadd.f32 0.0, %v1041
        %1043 = vdwg.mxu0
        %v1045 = vsel %vm576, %v914, 0
        %1047 = vmatpush.msra.mxu0 0.0
        %1048 = vmatpush.msra.mxu0 0.0
        %1049 = vmatpush.msra.mxu0 0.0
        %1050 = vmatpush.msra.mxu0 0.0
        %1051 = vmatpush.msra.mxu0 0.0
        %1052 = vmatpush.msra.mxu0 0.0
        %1053 = vmatpush.msra.mxu0 0.0
        %1054 = vmatpush.msra.mxu0 0.0
        %1055 = vmatpush.msra.mxu0 0.0
        %1056 = vmatpush.msra.mxu0 0.0
        %1057 = vmatpush.msra.mxu0 0.0
        %1058 = vmatpush.msra.mxu0 0.0
        %1059 = vmatpush.msra.mxu0 0.0
        %1060 = vmatpush.msra.mxu0 0.0
        %1061 = vmatpush.msra.mxu0 0.0
        %1062 = vmatpush.msra.mxu0 %v551
        %1063 = vmatmul.f32.gmra.mxu0 %v1045
        %v1064 = vpop.f32.mrf.mxu0
        %v1065 = vadd.f32 0.0, %v1064
        %1066 = vdwg.mxu0
        %v1068 = vsel %vm576, %v929, 0
        %1070 = vmatpush.msra.mxu0 0.0
        %1071 = vmatpush.msra.mxu0 0.0
        %1072 = vmatpush.msra.mxu0 0.0
        %1073 = vmatpush.msra.mxu0 0.0
        %1074 = vmatpush.msra.mxu0 0.0
        %1075 = vmatpush.msra.mxu0 0.0
        %1076 = vmatpush.msra.mxu0 0.0
        %1077 = vmatpush.msra.mxu0 0.0
        %1078 = vmatpush.msra.mxu0 0.0
        %1079 = vmatpush.msra.mxu0 0.0
        %1080 = vmatpush.msra.mxu0 0.0
        %1081 = vmatpush.msra.mxu0 0.0
        %1082 = vmatpush.msra.mxu0 0.0
        %1083 = vmatpush.msra.mxu0 0.0
        %1084 = vmatpush.msra.mxu0 0.0
        %1085 = vmatpush.msra.mxu0 %v555
        %1086 = vmatmul.f32.gmra.mxu0 %v1068
        %v1087 = vpop.f32.mrf.mxu0
        %v1088 = vadd.f32 0.0, %v1087
        %1089 = vdwg.mxu0
        %v1091 = vsel %vm576, %v944, 0
        %1093 = vmatpush.msra.mxu0 0.0
        %1094 = vmatpush.msra.mxu0 0.0
        %1095 = vmatpush.msra.mxu0 0.0
        %1096 = vmatpush.msra.mxu0 0.0
        %1097 = vmatpush.msra.mxu0 0.0
        %1098 = vmatpush.msra.mxu0 0.0
        %1099 = vmatpush.msra.mxu0 0.0
        %1100 = vmatpush.msra.mxu0 0.0
        %1101 = vmatpush.msra.mxu0 0.0
        %1102 = vmatpush.msra.mxu0 0.0
        %1103 = vmatpush.msra.mxu0 0.0
        %1104 = vmatpush.msra.mxu0 0.0
        %1105 = vmatpush.msra.mxu0 0.0
        %1106 = vmatpush.msra.mxu0 0.0
        %1107 = vmatpush.msra.mxu0 0.0
        %1108 = vmatpush.msra.mxu0 %v557
        %1109 = vmatmul.f32.gmra.mxu0 %v1091
        %v1110 = vpop.f32.mrf.mxu0
        %v1111 = vadd.f32 0.0, %v1110
        %1112 = vdwg.mxu0
        %v1114 = vsel %vm576, %v959, 0
        %1116 = vmatpush.msra.mxu0 0.0
        %1117 = vmatpush.msra.mxu0 0.0
        %1118 = vmatpush.msra.mxu0 0.0
        %1119 = vmatpush.msra.mxu0 0.0
        %1120 = vmatpush.msra.mxu0 0.0
        %1121 = vmatpush.msra.mxu0 0.0
        %1122 = vmatpush.msra.mxu0 0.0
        %1123 = vmatpush.msra.mxu0 0.0
        %1124 = vmatpush.msra.mxu0 0.0
        %1125 = vmatpush.msra.mxu0 0.0
        %1126 = vmatpush.msra.mxu0 0.0
        %1127 = vmatpush.msra.mxu0 0.0
        %1128 = vmatpush.msra.mxu0 0.0
        %1129 = vmatpush.msra.mxu0 0.0
        %1130 = vmatpush.msra.mxu0 0.0
        %1131 = vmatpush.msra.mxu0 %v561
        %1132 = vmatmul.f32.gmra.mxu0 %v1114
        %v1133 = vpop.f32.mrf.mxu0
        %v1134 = vadd.f32 0.0, %v1133
        %1135 = vdwg.mxu0
        %v1137 = vsel %vm576, %v974, 0
        %1139 = vmatpush.msra.mxu0 0.0
        %1140 = vmatpush.msra.mxu0 0.0
        %1141 = vmatpush.msra.mxu0 0.0
        %1142 = vmatpush.msra.mxu0 0.0
        %1143 = vmatpush.msra.mxu0 0.0
        %1144 = vmatpush.msra.mxu0 0.0
        %1145 = vmatpush.msra.mxu0 0.0
        %1146 = vmatpush.msra.mxu0 0.0
        %1147 = vmatpush.msra.mxu0 0.0
        %1148 = vmatpush.msra.mxu0 0.0
        %1149 = vmatpush.msra.mxu0 0.0
        %1150 = vmatpush.msra.mxu0 0.0
        %1151 = vmatpush.msra.mxu0 0.0
        %1152 = vmatpush.msra.mxu0 0.0
        %1153 = vmatpush.msra.mxu0 0.0
        %1154 = vmatpush.msra.mxu0 %v563
        %1155 = vmatmul.f32.gmra.mxu0 %v1137
        %v1156 = vpop.f32.mrf.mxu0
        %v1157 = vadd.f32 0.0, %v1156
        %1158 = vdwg.mxu0
        %1161 = vrot.lane.b32.xlu0 %v1042, 8
        %v1162 = vpop.permute.xlu0 %1161
        %1163 = vrot.lane.b32.xlu0 %v1065, 8
        %v1164 = vpop.permute.xlu0 %1163
        %1169 = vrot.lane.b32.xlu0 %v1088, 16
        %v1170 = vpop.permute.xlu0 %1169
        %1171 = vrot.lane.b32.xlu0 %v1111, 16
        %v1172 = vpop.permute.xlu0 %1171
        %1177 = vrot.lane.b32.xlu0 %v1134, 24
        %v1178 = vpop.permute.xlu0 %1177
        %1179 = vrot.lane.b32.xlu0 %v1157, 24
        %v1180 = vpop.permute.xlu0 %1179
        %v1183 = vsel %vm576, %v996, %v1162
        %v1184 = vsel %vm576, %v1019, %v1164
        %vm1185 = vcmask 130048
        %v1186 = vsel %vm1185, %v1183, %v1170
        %v1187 = vsel %vm1185, %v1184, %v1172
        %vm1188 = vcmask 195584
        %v1189 = vsel %vm1188, %v1186, %v1178
        %v1190 = vsel %vm1188, %v1187, %v1180
        %v1191 = vld [vmem:[%s337] sm:$0xff]
        %v1192 = vld [vmem:[%s337 + $0x8] sm:$0xff]
        %v1193 = vld [vmem:[%s337 + $0x10] sm:$0xff]
        %v1194 = vld [vmem:[%s337 + $0x18] sm:$0xff]
        %vm1195 = vcmask 261120
        %v1197 = vsel %vm1195, %v1189, 0
        %v1200 = vsel %vm1195, %v1190, 0
        %1202 = vmatpush.msra.mxu0 0.0
        %1203 = vmatpush.msra.mxu0 0.0
        %1204 = vmatpush.msra.mxu0 0.0
        %1205 = vmatpush.msra.mxu0 0.0
        %1206 = vmatpush.msra.mxu0 0.0
        %1207 = vmatpush.msra.mxu0 0.0
        %1208 = vmatpush.msra.mxu0 0.0
        %1209 = vmatpush.msra.mxu0 0.0
        %1210 = vmatpush.msra.mxu0 0.0
        %1211 = vmatpush.msra.mxu0 0.0
        %1212 = vmatpush.msra.mxu0 0.0
        %1213 = vmatpush.msra.mxu0 0.0
        %1214 = vmatpush.msra.mxu0 %v1194
        %1215 = vmatpush.msra.mxu0 %v1193
        %1216 = vmatpush.msra.mxu0 %v1192
        %1217 = vmatpush.msra.mxu0 %v1191
        %1218 = vmatmul.f32.gmra.mxu0 %v1197
        %v1219 = vpop.f32.mrf.mxu0
        %v1220 = vadd.f32 0.0, %v1219
        %1221 = vmatmul.f32.gmra.mxu0 %v1200
        %v1222 = vpop.f32.mrf.mxu0
        %v1223 = vadd.f32 0.0, %v1222
        %1224 = vdwg.mxu0
        %v1225 = vmax.f32 %v1220, 0.0
        %v1226 = vmax.f32 %v1223, 0.0
        %v1227 = vld [vmem:[%s342] sm:$0xff]
        %v1228 = vld [vmem:[%s342 + $0x8] sm:$0xff]
        %v1229 = vld [vmem:[%s342 + $0x10] sm:$0xff]
        %v1230 = vld [vmem:[%s342 + $0x18] sm:$0xff]
        %v1231 = vld [vmem:[%s342 + $0x20] sm:$0xff]
        %v1232 = vld [vmem:[%s342 + $0x28] sm:$0xff]
        %v1233 = vld [vmem:[%s342 + $0x30] sm:$0xff]
        %v1234 = vld [vmem:[%s342 + $0x38] sm:$0xff]
        %v1235 = vld [vmem:[%s342 + $0x40] sm:$0xff]
        %v1236 = vld [vmem:[%s342 + $0x48] sm:$0xff]
        %v1237 = vld [vmem:[%s342 + $0x50] sm:$0xff]
        %v1238 = vld [vmem:[%s342 + $0x58] sm:$0xff]
        %v1239 = vld [vmem:[%s342 + $0x60] sm:$0xff]
        %v1240 = vld [vmem:[%s342 + $0x68] sm:$0xff]
        %v1241 = vld [vmem:[%s342 + $0x70] sm:$0xff]
        %v1242 = vld [vmem:[%s342 + $0x78] sm:$0xff]
        %1243 = vmatpush.msra.mxu0 %v1242
        %1244 = vmatpush.msra.mxu0 %v1241
        %1245 = vmatpush.msra.mxu0 %v1240
        %1246 = vmatpush.msra.mxu0 %v1239
        %1247 = vmatpush.msra.mxu0 %v1238
        %1248 = vmatpush.msra.mxu0 %v1237
        %1249 = vmatpush.msra.mxu0 %v1236
        %1250 = vmatpush.msra.mxu0 %v1235
        %1251 = vmatpush.msra.mxu0 %v1234
        %1252 = vmatpush.msra.mxu0 %v1233
        %1253 = vmatpush.msra.mxu0 %v1232
        %1254 = vmatpush.msra.mxu0 %v1231
        %1255 = vmatpush.msra.mxu0 %v1230
        %1256 = vmatpush.msra.mxu0 %v1229
        %1257 = vmatpush.msra.mxu0 %v1228
        %1258 = vmatpush.msra.mxu0 %v1227
        %1259 = vmatmul.f32.gmra.mxu0 %v1225
        %v1260 = vpop.f32.mrf.mxu0
        %v1261 = vadd.f32 0.0, %v1260
        %1262 = vmatmul.f32.gmra.mxu0 %v1226
        %v1263 = vpop.f32.mrf.mxu0
        %v1264 = vadd.f32 0.0, %v1263
        %1265 = vdwg.mxu0
        %1266 = vadd.xlane.f32.xlu0 %v1261
        %v1267 = vpop.xlane.xlu0 %1266
        %1268 = vadd.xlane.f32.xlu0 %v1264
        %v1269 = vpop.xlane.xlu0 %1268
        %v1270 = vmul.f32 %v1267, 0.03125
        %v1271 = vmul.f32 %v1269, 0.03125
        %v1272 = vmul.f32 %v1261, %v1261
        %v1273 = vmul.f32 %v1264, %v1264
        %1274 = vadd.xlane.f32.xlu0 %v1272
        %v1275 = vpop.xlane.xlu0 %1274
        %1276 = vadd.xlane.f32.xlu0 %v1273
        %v1277 = vpop.xlane.xlu0 %1276
        %v1278 = vmul.f32 %v1275, 0.03125
        %v1279 = vmul.f32 %v1277, 0.03125
        %v1280 = vmul.f32 %v1270, %v1270
        %v1281 = vmul.f32 %v1271, %v1271
        %v1282 = vsub.f32 %v1278, %v1280
        %v1283 = vsub.f32 %v1279, %v1281
        %v1284 = vsub.f32 %v1261, %v1270
        %v1285 = vsub.f32 %v1264, %v1271
        %v1286 = vadd.f32 %v1282, 1e-05
        %v1287 = vadd.f32 %v1283, 1e-05
        %v1288 = vrsqrt.pop %v1286
        %v1289 = vmul.f32 %v1288, %v1286
        %v1290 = vmul.f32 %v1289, %v1288
        %v1291 = vmul.f32 0.5, %v1290
        %v1292 = vsub.f32 1.5, %v1291
        %v1293 = vmul.f32 %v1288, %v1292
        %vm1294 = vweird.f32 %v1286
        %vm1295 = vweird.f32 %v1288
        %vm1296 = vmor %vm1294, %vm1295
        %v1297 = vsel %vm1296, %v1288, %v1293
        %v1298 = vrsqrt.pop %v1287
        %v1299 = vmul.f32 %v1298, %v1287
        %v1300 = vmul.f32 %v1299, %v1298
        %v1301 = vmul.f32 0.5, %v1300
        %v1302 = vsub.f32 1.5, %v1301
        %v1303 = vmul.f32 %v1298, %v1302
        %vm1304 = vweird.f32 %v1287
        %vm1305 = vweird.f32 %v1298
        %vm1306 = vmor %vm1304, %vm1305
        %v1307 = vsel %vm1306, %v1298, %v1303
        %v1308 = vmul.f32 %v1284, %v1297
        %v1309 = vmul.f32 %v1285, %v1307
        %v1310 = vld [vmem:[%s345] sm:$0x1]
        %v1312 = vperm.slane %v1310, 0
        %v1314 = vmul.f32 %v1308, %v1312
        %v1315 = vmul.f32 %v1309, %v1312
        %v1316 = vadd.f32 %v1314, %v384
        %v1317 = vadd.f32 %v1315, %v385
        %1318 = vst [vmem:[#allocation2] sm:$0xff] %v1316
        %1319 = vst [vmem:[#allocation2 + $0x8] sm:$0xff] %v1317
        %p1320 = scmp.eq.s32.totalorder %s20, 1
        // Predicated region
        $region57: #{tpu_custom_call.1} parent=51 // pred_check
          %p1321 = pneg %p1320
        $region58: #{tpu_custom_call.1} parent=51 // pred_check_branch
          %1323 = sbr.rel (%p1321) target = $region60
        $region59: #{tpu_custom_call.1} parent=51 // pred_region
          %1324 = vst [vmem:[#allocation4] sm:$0xff] %v1316
          %1325 = vst [vmem:[#allocation4 + $0x8] sm:$0xff] %v1317
        $region60: #{tpu_custom_call.1} parent=51 // pred_fallthru
          _
        // Predicated region
        $region61: #{tpu_custom_call.1} parent=51 // pred_check
          %p1326 = pneg %p221
        $region62: #{tpu_custom_call.1} parent=51 // pred_check_branch
          %1328 = sbr.rel (%p1326) target = $region64
        $region63: #{tpu_custom_call.1} parent=51 // pred_region
          %1330 = vsyncadd [#allocation5], 0
          %s1331 = sshll.u32 [#allocation4], 4
          %s1332 = int_to_ptr.vmem [resolvable:$true] %s1331
          %s1333 = sshll.u32 %s8, 4
          %s1334 = int_to_ptr.hbm [resolvable:$true] %s1333
          %1339 = dma.vmem_to_hbm [thread:$0]  %s1332, 256, %s1334, [#allocation5], 128, 128, 8
        $region64: #{tpu_custom_call.1} parent=51 // pred_fallthru
          _
        // Predicated region
        $region65: #{tpu_custom_call.1} parent=51 // pred_check
          %p1340 = pneg %p221
        $region66: #{tpu_custom_call.1} parent=51 // pred_check_branch
          %1342 = sbr.rel (%p1340) target = $region68
        $region67: #{tpu_custom_call.1} parent=51 // pred_region
          %1344 = dma.done [#allocation5], 256
        $region68: #{tpu_custom_call.1} parent=51 // pred_fallthru
          _
      $region52: #{tpu_custom_call.1} parent=5 // pred_fallthru
        _
      %p1345 = scmp.le.s32.totalorder 2, %s15
      // Predicated region
      $region69: #{tpu_custom_call.1} parent=5 // pred_check
        %p1346 = pneg %p1345
      $region70: #{tpu_custom_call.1} parent=5 // pred_check_branch
        %1348 = sbr.rel (%p1346) target = $region72
      $region71: #{tpu_custom_call.1} parent=5 // pred_region
        %s1349 = ssub.s32 %s15, 2
      $region72: #{tpu_custom_call.1} parent=5 // pred_fallthru
        _
    $region6: #{tpu_custom_call.1} parent=1 // loop_footer
      %s19 = sadd.s32 1, %s15
    $region7: #{tpu_custom_call.1} parent=1 // loop_footer_branch
      %14 = sbr.rel target = $region3
    $region8: #{tpu_custom_call.1} parent=1 // loop_exit
      _
    %1350 = vsyncpa [#allocation5], 1
    %s1351 = scalar_lea.sflag [#allocation5], 1
    %1352 = vsyncpa %s1351, 1

</llo_original>
